<compile_context>
chip_gen: v7x
topology: tpu7x:2x2x1
jax: 0.10.0
libtpu: 0.0.40
codegen_flags: <defaults>
</compile_context>

<pallas_src>
import functools
import math
from dataclasses import dataclass

import jax
import jax.numpy as jnp
from jax import lax
from jax.experimental import pallas as pl
from jax.experimental.pallas import tpu as pltpu


@dataclass
class Config:
    d_model: int = 768
    debug: bool = True
    layer_norm_eps: float = 1e-5
    d_vocab: int = 50257
    init_range: float = 0.02
    n_ctx: int = 1024
    d_head: int = 64
    d_mlp: int = 3072
    n_heads: int = 12
    n_layers: int = 12


IGNORE = -1.0e5  # matches the PyTorch IGNORE buffer (-100000.0)


# --------------------------------------------------------------------------- #
# Fused attention kernel: one batch element per grid step.
# Refs:  x (S, D) f32, W_Q/K/V (H, D, dh) bf16, W_O (H, dh, D) bf16,
#        b_Q/K/V (H, 1, dh) f32 (already scaled for Q), b_O (1, D) f32.
# --------------------------------------------------------------------------- #
def _attention_kernel(n_heads, x_ref, wq_ref, wk_ref, wv_ref, wo_ref,
                      bq_ref, bk_ref, bv_ref, bo_ref, out_ref):
    S, D = x_ref.shape
    H = n_heads

    x = x_ref[...]                                                    # (S, D) f32
    xh = jnp.broadcast_to(x.astype(jnp.bfloat16)[None], (H, S, D))    # (H, S, D) bf16

    # ---- Q/K/V projections: one batched contraction each (batch dim = heads) ----
    q = jnp.einsum('hsd,hdk->hsk', xh, wq_ref[...],
                   preferred_element_type=jnp.float32) + bq_ref[...]  # (H, S, dh)
    k = jnp.einsum('hsd,hdk->hsk', xh, wk_ref[...],
                   preferred_element_type=jnp.float32) + bk_ref[...]
    v = jnp.einsum('hsd,hdk->hsk', xh, wv_ref[...],
                   preferred_element_type=jnp.float32) + bv_ref[...]

    # ---- scores (1/sqrt(d_head) already folded into W_Q/b_Q) ----
    scores = jnp.einsum('hqd,hkd->hqk',
                        q.astype(jnp.bfloat16), k.astype(jnp.bfloat16),
                        preferred_element_type=jnp.float32)           # (H, S, S)

    rows = lax.broadcasted_iota(jnp.int32, (H, S, S), 1)
    cols = lax.broadcasted_iota(jnp.int32, (H, S, S), 2)
    scores = jnp.where(cols > rows, jnp.float32(IGNORE), scores)      # causal mask

    # ---- softmax over key positions (f32; EUP reciprocal for normalization) ----
    m = jnp.max(scores, axis=-1, keepdims=True)
    e = jnp.exp(scores - m)
    p = e * pl.reciprocal(jnp.sum(e, axis=-1, keepdims=True), approx=True)

    # ---- weighted values + output projection ----
    z = jnp.einsum('hqk,hkd->hqd',
                   p.astype(jnp.bfloat16), v.astype(jnp.bfloat16),
                   preferred_element_type=jnp.float32)                # (H, S, dh)
    per_head = jnp.einsum('hqd,hdm->hqm',
                          z.astype(jnp.bfloat16), wo_ref[...],
                          preferred_element_type=jnp.float32)         # (H, S, D)
    out_ref[...] = jnp.sum(per_head, axis=0) + bo_ref[...]            # (S, D)


def attention_forward(x, params, cfg: Config):
    """x: (batch, posn, d_model) f32 -> attn_out: (batch, posn, d_model) f32."""
    B, S, D = x.shape
    H, dh = cfg.n_heads, cfg.d_head
    scale = 1.0 / math.sqrt(cfg.d_head)

    # Fold the 1/sqrt(d_head) score scale into W_Q / b_Q; ship MXU weights as bf16.
    wq = (params["W_Q"] * scale).astype(jnp.bfloat16)      # (H, D, dh)
    wk = params["W_K"].astype(jnp.bfloat16)
    wv = params["W_V"].astype(jnp.bfloat16)
    wo = params["W_O"].astype(jnp.bfloat16)                # (H, dh, D)
    bq = (params["b_Q"] * scale).reshape(H, 1, dh).astype(jnp.float32)
    bk = params["b_K"].reshape(H, 1, dh).astype(jnp.float32)
    bv = params["b_V"].reshape(H, 1, dh).astype(jnp.float32)
    bo = params["b_O"].reshape(1, D).astype(jnp.float32)
    weights = [wq, wk, wv, wo, bq, bk, bv, bo]

    in_specs = [pl.BlockSpec((pl.Squeezed(), S, D), lambda b: (b, 0, 0))]
    for w in weights:
        in_specs.append(pl.BlockSpec(w.shape, lambda b, nd=w.ndim: (0,) * nd))

    kernel = functools.partial(_attention_kernel, H)
    return pl.pallas_call(
        kernel,
        out_shape=jax.ShapeDtypeStruct((B, S, D), jnp.float32),
        grid=(B,),
        in_specs=in_specs,
        out_specs=pl.BlockSpec((pl.Squeezed(), S, D), lambda b: (b, 0, 0)),
        compiler_params=pltpu.CompilerParams(dimension_semantics=("parallel",)),
    )(x.astype(jnp.float32), *weights)


# --------------------------------------------------------------------------- #
# Pure-JAX reference (f32) mirroring the PyTorch module, for a sanity check.
# --------------------------------------------------------------------------- #
def attention_reference(x, params, cfg: Config):
    q = jnp.einsum('bsd,hdk->bshk', x, params["W_Q"]) + params["b_Q"]
    k = jnp.einsum('bsd,hdk->bshk', x, params["W_K"]) + params["b_K"]
    v = jnp.einsum('bsd,hdk->bshk', x, params["W_V"]) + params["b_V"]
    scores = jnp.einsum('bqhd,bkhd->bhqk', q, k) / math.sqrt(cfg.d_head)
    S = x.shape[1]
    mask = jnp.triu(jnp.ones((S, S), bool), k=1)
    scores = jnp.where(mask, jnp.float32(IGNORE), scores)
    pattern = jax.nn.softmax(scores, axis=-1)
    z = jnp.einsum('bkhd,bhqk->bqhd', v, pattern)
    return jnp.einsum('bqhd,hdm->bqm', z, params["W_O"]) + params["b_O"]


def init_params(key, cfg: Config):
    H, D, dh = cfg.n_heads, cfg.d_model, cfg.d_head
    std = cfg.init_range
    kq, kk, kv, ko = jax.random.split(key, 4)
    return {
        "W_Q": std * jax.random.normal(kq, (H, D, dh), dtype=jnp.float32),
        "W_K": std * jax.random.normal(kk, (H, D, dh), dtype=jnp.float32),
        "W_V": std * jax.random.normal(kv, (H, D, dh), dtype=jnp.float32),
        "W_O": std * jax.random.normal(ko, (H, dh, D), dtype=jnp.float32),
        "b_Q": jnp.zeros((H, dh), jnp.float32),
        "b_K": jnp.zeros((H, dh), jnp.float32),
        "b_V": jnp.zeros((H, dh), jnp.float32),
        "b_O": jnp.zeros((D,), jnp.float32),
    }


if __name__ == "__main__":
    # Scaled-down config (d_model = n_heads * d_head), lane-dense d_model=128.
    cfg = Config(d_model=128, d_head=32, n_heads=4, n_ctx=32,
                 d_mlp=512, d_vocab=1000, n_layers=1)

    root_key = jax.random.PRNGKey(0)
    pkey, xkey = jax.random.split(root_key)
    params = init_params(pkey, cfg)

    batch, seq = 2, 8
    normalized_resid_pre = jax.random.normal(
        xkey, (batch, seq, cfg.d_model), dtype=jnp.float32)

    out = attention_forward(normalized_resid_pre, params, cfg)
    out = jax.block_until_ready(out)

    assert out.shape == (batch, seq, cfg.d_model)
    assert bool(jnp.all(jnp.isfinite(out)))

    ref = attention_reference(normalized_resid_pre, params, cfg)
    max_err = float(jnp.max(jnp.abs(out - ref)))
    assert max_err < 2e-2, f"max |err| vs f32 reference = {max_err}"

    print("KERNEL_OK")
</pallas_src>

<mosaic_0001>
module attributes {stable_mosaic.version = 11 : i64} {
  func.func @_attention_kernel(%arg0: i32, %arg1: memref<1x8x128xf32, #tpu.memory_space<vmem>>, %arg2: memref<4x128x32xbf16, #tpu.memory_space<vmem>>, %arg3: memref<4x128x32xbf16, #tpu.memory_space<vmem>>, %arg4: memref<4x128x32xbf16, #tpu.memory_space<vmem>>, %arg5: memref<4x32x128xbf16, #tpu.memory_space<vmem>>, %arg6: memref<4x1x32xf32, #tpu.memory_space<vmem>>, %arg7: memref<4x1x32xf32, #tpu.memory_space<vmem>>, %arg8: memref<4x1x32xf32, #tpu.memory_space<vmem>>, %arg9: memref<1x128xf32, #tpu.memory_space<vmem>>, %arg10: memref<1x8x128xf32, #tpu.memory_space<vmem>>) attributes {dimension_semantics = [#tpu.dimension_semantics<parallel>], iteration_bounds = array<i64: 2>, scalar_prefetch = 0 : i64, scratch_operands = 0 : i64, tpu.core_type = #tpu.core_type<tc>, window_params = [{transform_indices = @transform_0, window_bounds = array<i64: 1, 8, 128>}, {pipeline_mode = #tpu.pipeline_mode<synchronous>, transform_indices = @transform_1, window_bounds = array<i64: 4, 128, 32>}, {pipeline_mode = #tpu.pipeline_mode<synchronous>, transform_indices = @transform_2, window_bounds = array<i64: 4, 128, 32>}, {pipeline_mode = #tpu.pipeline_mode<synchronous>, transform_indices = @transform_3, window_bounds = array<i64: 4, 128, 32>}, {pipeline_mode = #tpu.pipeline_mode<synchronous>, transform_indices = @transform_4, window_bounds = array<i64: 4, 32, 128>}, {pipeline_mode = #tpu.pipeline_mode<synchronous>, transform_indices = @transform_5, window_bounds = array<i64: 4, 1, 32>}, {pipeline_mode = #tpu.pipeline_mode<synchronous>, transform_indices = @transform_6, window_bounds = array<i64: 4, 1, 32>}, {pipeline_mode = #tpu.pipeline_mode<synchronous>, transform_indices = @transform_7, window_bounds = array<i64: 4, 1, 32>}, {pipeline_mode = #tpu.pipeline_mode<synchronous>, transform_indices = @transform_8, window_bounds = array<i64: 1, 128>}, {transform_indices = @transform_9, window_bounds = array<i64: 1, 8, 128>}]} {
    %c0 = arith.constant 0 : index
    %c0_0 = arith.constant 0 : index
    %c0_1 = arith.constant 0 : index
    %0 = vector.load %arg1[%c0, %c0_0, %c0_1] : memref<1x8x128xf32, #tpu.memory_space<vmem>>, vector<1x8x128xf32>
    %1 = vector.shape_cast %0 : vector<1x8x128xf32> to vector<8x128xf32>
    %2 = arith.truncf %1 : vector<8x128xf32> to vector<8x128xbf16>
    %3 = vector.shape_cast %2 : vector<8x128xbf16> to vector<1x8x128xbf16>
    %4 = vector.shape_cast %3 : vector<1x8x128xbf16> to vector<1x8x128xbf16>
    %5 = vector.broadcast %4 : vector<1x8x128xbf16> to vector<4x8x128xbf16>
    %c0_2 = arith.constant 0 : index
    %c0_3 = arith.constant 0 : index
    %c0_4 = arith.constant 0 : index
    %6 = vector.load %arg2[%c0_2, %c0_3, %c0_4] : memref<4x128x32xbf16, #tpu.memory_space<vmem>>, vector<4x128x32xbf16>
    "tpu.trace_start"() <{level = 10 : i32, message = "hsd,hdk->hsk"}> : () -> ()
    %cst = arith.constant dense<0.000000e+00> : vector<4x8x32xf32>
    %7 = tpu.matmul %5, %6, %cst {dimension_numbers = #tpu.dot_dimension_numbers<[2], [1], [1], [2], [0, 0, 0, 1, 1, 2], [0], [0]>} : vector<4x8x128xbf16>, vector<4x128x32xbf16>, vector<4x8x32xf32> -> vector<4x8x32xf32>
    "tpu.trace_stop"() : () -> ()
    %c0_5 = arith.constant 0 : index
    %c0_6 = arith.constant 0 : index
    %c0_7 = arith.constant 0 : index
    %8 = vector.load %arg6[%c0_5, %c0_6, %c0_7] : memref<4x1x32xf32, #tpu.memory_space<vmem>>, vector<4x1x32xf32>
    %9 = vector.broadcast %8 : vector<4x1x32xf32> to vector<4x8x32xf32>
    %10 = arith.addf %7, %9 : vector<4x8x32xf32>
    %c0_8 = arith.constant 0 : index
    %c0_9 = arith.constant 0 : index
    %c0_10 = arith.constant 0 : index
    %11 = vector.load %arg3[%c0_8, %c0_9, %c0_10] : memref<4x128x32xbf16, #tpu.memory_space<vmem>>, vector<4x128x32xbf16>
    "tpu.trace_start"() <{level = 10 : i32, message = "hsd,hdk->hsk"}> : () -> ()
    %cst_11 = arith.constant dense<0.000000e+00> : vector<4x8x32xf32>
    %12 = tpu.matmul %5, %11, %cst_11 {dimension_numbers = #tpu.dot_dimension_numbers<[2], [1], [1], [2], [0, 0, 0, 1, 1, 2], [0], [0]>} : vector<4x8x128xbf16>, vector<4x128x32xbf16>, vector<4x8x32xf32> -> vector<4x8x32xf32>
    "tpu.trace_stop"() : () -> ()
    %c0_12 = arith.constant 0 : index
    %c0_13 = arith.constant 0 : index
    %c0_14 = arith.constant 0 : index
    %13 = vector.load %arg7[%c0_12, %c0_13, %c0_14] : memref<4x1x32xf32, #tpu.memory_space<vmem>>, vector<4x1x32xf32>
    %14 = vector.broadcast %13 : vector<4x1x32xf32> to vector<4x8x32xf32>
    %15 = arith.addf %12, %14 : vector<4x8x32xf32>
    %c0_15 = arith.constant 0 : index
    %c0_16 = arith.constant 0 : index
    %c0_17 = arith.constant 0 : index
    %16 = vector.load %arg4[%c0_15, %c0_16, %c0_17] : memref<4x128x32xbf16, #tpu.memory_space<vmem>>, vector<4x128x32xbf16>
    "tpu.trace_start"() <{level = 10 : i32, message = "hsd,hdk->hsk"}> : () -> ()
    %cst_18 = arith.constant dense<0.000000e+00> : vector<4x8x32xf32>
    %17 = tpu.matmul %5, %16, %cst_18 {dimension_numbers = #tpu.dot_dimension_numbers<[2], [1], [1], [2], [0, 0, 0, 1, 1, 2], [0], [0]>} : vector<4x8x128xbf16>, vector<4x128x32xbf16>, vector<4x8x32xf32> -> vector<4x8x32xf32>
    "tpu.trace_stop"() : () -> ()
    %c0_19 = arith.constant 0 : index
    %c0_20 = arith.constant 0 : index
    %c0_21 = arith.constant 0 : index
    %18 = vector.load %arg8[%c0_19, %c0_20, %c0_21] : memref<4x1x32xf32, #tpu.memory_space<vmem>>, vector<4x1x32xf32>
    %19 = vector.broadcast %18 : vector<4x1x32xf32> to vector<4x8x32xf32>
    %20 = arith.addf %17, %19 : vector<4x8x32xf32>
    %21 = arith.truncf %10 : vector<4x8x32xf32> to vector<4x8x32xbf16>
    %22 = arith.truncf %15 : vector<4x8x32xf32> to vector<4x8x32xbf16>
    "tpu.trace_start"() <{level = 10 : i32, message = "hqd,hkd->hqk"}> : () -> ()
    %cst_22 = arith.constant dense<0.000000e+00> : vector<4x8x8xf32>
    %23 = tpu.matmul %21, %22, %cst_22 {dimension_numbers = #tpu.dot_dimension_numbers<[2], [2], [1], [1], [0, 0, 0, 1, 1, 1], [0], [0]>} : vector<4x8x32xbf16>, vector<4x8x32xbf16>, vector<4x8x8xf32> -> vector<4x8x8xf32>
    "tpu.trace_stop"() : () -> ()
    %24 = tpu.iota {dimensions = array<i32: 1>} : vector<4x8x8xi32>
    %25 = tpu.iota {dimensions = array<i32: 2>} : vector<4x8x8xi32>
    %26 = arith.cmpi sgt, %25, %24 : vector<4x8x8xi32>
    %cst_23 = arith.constant -1.000000e+05 : f32
    %27 = vector.broadcast %cst_23 : f32 to vector<4x8x8xf32>
    %28 = arith.select %26, %27, %23 : vector<4x8x8xi1>, vector<4x8x8xf32>
    %cst_24 = arith.constant dense<0xFF800000> : vector<4x8xf32>
    %29 = vector.multi_reduction <maximumf>, %28, %cst_24 [2] : vector<4x8x8xf32> to vector<4x8xf32>
    %30 = vector.shape_cast %29 : vector<4x8xf32> to vector<4x8x1xf32>
    %31 = vector.broadcast %30 : vector<4x8x1xf32> to vector<4x8x8xf32>
    %32 = arith.subf %28, %31 : vector<4x8x8xf32>
    %33 = math.exp %32 : vector<4x8x8xf32>
    %cst_25 = arith.constant dense<0.000000e+00> : vector<4x8xf32>
    %34 = vector.multi_reduction <add>, %33, %cst_25 [2] : vector<4x8x8xf32> to vector<4x8xf32>
    %35 = vector.shape_cast %34 : vector<4x8xf32> to vector<4x8x1xf32>
    %36 = tpu.reciprocal %35 {approx = true} : vector<4x8x1xf32> -> vector<4x8x1xf32>
    %37 = vector.broadcast %36 : vector<4x8x1xf32> to vector<4x8x8xf32>
    %38 = arith.mulf %33, %37 : vector<4x8x8xf32>
    %39 = arith.truncf %38 : vector<4x8x8xf32> to vector<4x8x8xbf16>
    %40 = arith.truncf %20 : vector<4x8x32xf32> to vector<4x8x32xbf16>
    "tpu.trace_start"() <{level = 10 : i32, message = "hqk,hkd->hqd"}> : () -> ()
    %cst_26 = arith.constant dense<0.000000e+00> : vector<4x8x32xf32>
    %41 = tpu.matmul %39, %40, %cst_26 {dimension_numbers = #tpu.dot_dimension_numbers<[2], [1], [1], [2], [0, 0, 0, 1, 1, 2], [0], [0]>} : vector<4x8x8xbf16>, vector<4x8x32xbf16>, vector<4x8x32xf32> -> vector<4x8x32xf32>
    "tpu.trace_stop"() : () -> ()
    %42 = arith.truncf %41 : vector<4x8x32xf32> to vector<4x8x32xbf16>
    %c0_27 = arith.constant 0 : index
    %c0_28 = arith.constant 0 : index
    %c0_29 = arith.constant 0 : index
    %43 = vector.load %arg5[%c0_27, %c0_28, %c0_29] : memref<4x32x128xbf16, #tpu.memory_space<vmem>>, vector<4x32x128xbf16>
    "tpu.trace_start"() <{level = 10 : i32, message = "hqd,hdm->hqm"}> : () -> ()
    %cst_30 = arith.constant dense<0.000000e+00> : vector<4x8x128xf32>
    %44 = tpu.matmul %42, %43, %cst_30 {dimension_numbers = #tpu.dot_dimension_numbers<[2], [1], [1], [2], [0, 0, 0, 1, 1, 2], [0], [0]>} : vector<4x8x32xbf16>, vector<4x32x128xbf16>, vector<4x8x128xf32> -> vector<4x8x128xf32>
    "tpu.trace_stop"() : () -> ()
    %cst_31 = arith.constant dense<0.000000e+00> : vector<8x128xf32>
    %45 = vector.multi_reduction <add>, %44, %cst_31 [0] : vector<4x8x128xf32> to vector<8x128xf32>
    %c0_32 = arith.constant 0 : index
    %c0_33 = arith.constant 0 : index
    %46 = vector.load %arg9[%c0_32, %c0_33] : memref<1x128xf32, #tpu.memory_space<vmem>>, vector<1x128xf32>
    %47 = vector.broadcast %46 : vector<1x128xf32> to vector<8x128xf32>
    %48 = arith.addf %45, %47 : vector<8x128xf32>
    %c0_34 = arith.constant 0 : index
    %c0_35 = arith.constant 0 : index
    %c0_36 = arith.constant 0 : index
    %49 = vector.load %arg10[%c0_34, %c0_35, %c0_36] : memref<1x8x128xf32, #tpu.memory_space<vmem>>, vector<1x8x128xf32>
    %50 = vector.shape_cast %49 : vector<1x8x128xf32> to vector<8x128xf32>
    %51 = vector.shape_cast %48 : vector<8x128xf32> to vector<1x8x128xf32>
    tpu.vector_store %arg10[%c0_34, %c0_35, %c0_36], %51 {strides = array<i32>} : memref<1x8x128xf32, #tpu.memory_space<vmem>>, vector<1x8x128xf32>,
    return
  }
  func.func @transform_0(%arg0: i32) -> (i32, i32, i32) {
    %c0_i32 = arith.constant 0 : i32
    %c0_i32_0 = arith.constant 0 : i32
    %c0_i32_1 = arith.constant 0 : i32
    return %arg0, %c0_i32, %c0_i32_0 : i32, i32, i32
  }
  func.func @transform_1(%arg0: i32) -> (i32, i32, i32) {
    %c0_i32 = arith.constant 0 : i32
    %c0_i32_0 = arith.constant 0 : i32
    %c0_i32_1 = arith.constant 0 : i32
    %c0_i32_2 = arith.constant 0 : i32
    return %c0_i32, %c0_i32_0, %c0_i32_1 : i32, i32, i32
  }
  func.func @transform_2(%arg0: i32) -> (i32, i32, i32) {
    %c0_i32 = arith.constant 0 : i32
    %c0_i32_0 = arith.constant 0 : i32
    %c0_i32_1 = arith.constant 0 : i32
    %c0_i32_2 = arith.constant 0 : i32
    return %c0_i32, %c0_i32_0, %c0_i32_1 : i32, i32, i32
  }
  func.func @transform_3(%arg0: i32) -> (i32, i32, i32) {
    %c0_i32 = arith.constant 0 : i32
    %c0_i32_0 = arith.constant 0 : i32
    %c0_i32_1 = arith.constant 0 : i32
    %c0_i32_2 = arith.constant 0 : i32
    return %c0_i32, %c0_i32_0, %c0_i32_1 : i32, i32, i32
  }
  func.func @transform_4(%arg0: i32) -> (i32, i32, i32) {
    %c0_i32 = arith.constant 0 : i32
    %c0_i32_0 = arith.constant 0 : i32
    %c0_i32_1 = arith.constant 0 : i32
    %c0_i32_2 = arith.constant 0 : i32
    return %c0_i32, %c0_i32_0, %c0_i32_1 : i32, i32, i32
  }
  func.func @transform_5(%arg0: i32) -> (i32, i32, i32) {
    %c0_i32 = arith.constant 0 : i32
    %c0_i32_0 = arith.constant 0 : i32
    %c0_i32_1 = arith.constant 0 : i32
    %c0_i32_2 = arith.constant 0 : i32
    return %c0_i32, %c0_i32_0, %c0_i32_1 : i32, i32, i32
  }
  func.func @transform_6(%arg0: i32) -> (i32, i32, i32) {
    %c0_i32 = arith.constant 0 : i32
    %c0_i32_0 = arith.constant 0 : i32
    %c0_i32_1 = arith.constant 0 : i32
    %c0_i32_2 = arith.constant 0 : i32
    return %c0_i32, %c0_i32_0, %c0_i32_1 : i32, i32, i32
  }
  func.func @transform_7(%arg0: i32) -> (i32, i32, i32) {
    %c0_i32 = arith.constant 0 : i32
    %c0_i32_0 = arith.constant 0 : i32
    %c0_i32_1 = arith.constant 0 : i32
    %c0_i32_2 = arith.constant 0 : i32
    return %c0_i32, %c0_i32_0, %c0_i32_1 : i32, i32, i32
  }
  func.func @transform_8(%arg0: i32) -> (i32, i32) {
    %c0_i32 = arith.constant 0 : i32
    %c0_i32_0 = arith.constant 0 : i32
    %c0_i32_1 = arith.constant 0 : i32
    return %c0_i32, %c0_i32_0 : i32, i32
  }
  func.func @transform_9(%arg0: i32) -> (i32, i32, i32) {
    %c0_i32 = arith.constant 0 : i32
    %c0_i32_0 = arith.constant 0 : i32
    %c0_i32_1 = arith.constant 0 : i32
    return %arg0, %c0_i32, %c0_i32_0 : i32, i32, i32
  }
}

</mosaic_0001>

<llo_original>
// kernel: tpu_custom_call.1
$region0: #{tpu_custom_call.1}
  #allocation0 [shape = 'u32[]', space=smem, size = 0x4, offset = 0x4, fixed_abs, tag = 'smem constant byte address 0x4 - core index']
  #allocation1 [shape = 'u32[144,128]{1,0:T(1,128)}', space=vmem, size = 0x12000, scoped, tag = 'internal scratch']
  %s0 = inlined_call_operand.vmem [shape: f32[2,8,128], index: 0, kind: input, shape index: {}]
  %s1 = inlined_call_operand.vmem [shape: bf16[4,128,32], index: 1, kind: input, shape index: {}]
  %s2 = inlined_call_operand.vmem [shape: bf16[4,128,32], index: 2, kind: input, shape index: {}]
  %s3 = inlined_call_operand.vmem [shape: bf16[4,128,32], index: 3, kind: input, shape index: {}]
  %s4 = inlined_call_operand.vmem [shape: bf16[4,32,128], index: 4, kind: input, shape index: {}]
  %s5 = inlined_call_operand.vmem [shape: f32[4,1,32], index: 5, kind: input, shape index: {}]
  %s6 = inlined_call_operand.vmem [shape: f32[4,1,32], index: 6, kind: input, shape index: {}]
  %s7 = inlined_call_operand.vmem [shape: f32[4,1,32], index: 7, kind: input, shape index: {}]
  %s8 = inlined_call_operand.vmem [shape: f32[1,128], index: 8, kind: input, shape index: {}]
  %s9 = inlined_call_operand.hbm [shape: f32[2,8,128], index: 9, kind: output, shape index: {}]
  %s10 = sld [smem:[#allocation0]]
  $region69: #{tpu_custom_call.1} parent=0
    _
  %s12 = ssub.s32 1, %s10
  %s13 = scalar_select 0, %s12, %s10
  $region1: #{tpu_custom_call.1} parent=0
    #allocation2 [shape = 'u8[8192]{0}', space=vmem, size = 0x2000, scoped, tag = 'output window, operand 0']
    #allocation3 [shape = 's32[2]{0}', space=sflag, size = 0x8, scoped, tag = 'scoped memory for tpu_custom_call.1']
    %14 = vsyncpa [#allocation3], 0
    %s15 = scalar_lea.sflag [#allocation3], 1
    %16 = vsyncpa %s15, 0
    loop: start=0, step=1, limit=4
    $region2: #{tpu_custom_call.1} parent=1 // loop_pre_header
      _
    $region3: #{tpu_custom_call.1} parent=1 // loop_header
      %s18 = sphi 0, %s22
      %p19 = scmp.ge.s32.totalorder %s18, 4
      %s28 = sphi 0, %s30
      %s31 = sphi 0, %s28
      %s32 = sphi 0, %s31
      %s48 = sphi 0, %s32
      %s52 = sphi 0, %s52
      %s54 = sphi 0, %s52
      %s55 = sphi 0, %s54
      %s69 = sphi 0, %s55
      %s73 = sphi 0, %s73
      %s75 = sphi 0, %s73
      %s76 = sphi 0, %s75
      %s90 = sphi 0, %s76
      %s94 = sphi 0, %s94
      %s96 = sphi 0, %s94
      %s97 = sphi 0, %s96
      %s111 = sphi 0, %s97
      %s115 = sphi 0, %s115
      %s117 = sphi 0, %s115
      %s118 = sphi 0, %s117
      %s132 = sphi 0, %s118
      %s136 = sphi 0, %s136
      %s138 = sphi 0, %s136
      %s139 = sphi 0, %s138
      %s153 = sphi 0, %s139
      %s157 = sphi 0, %s157
      %s159 = sphi 0, %s157
      %s160 = sphi 0, %s159
      %s174 = sphi 0, %s160
      %s178 = sphi 0, %s178
      %s180 = sphi 0, %s178
      %s181 = sphi 0, %s180
      %s195 = sphi 0, %s181
      %s199 = sphi 0, %s199
      %s201 = sphi 0, %s199
      %s202 = sphi 0, %s201
      %s216 = sphi 0, %s202
      %s222 = sphi 0, %s224
      %s225 = sphi 0, %s222
      %s226 = sphi 0, %s225
      %s242 = sphi 0, %s226
    $region4: #{tpu_custom_call.1} parent=1 // loop_header_branch
      %21 = sbr.rel (%p19) target = $region8
    $region5: #{tpu_custom_call.1} parent=1 // loop_body
      %s23 = ssub.s32 %s18, 1
      %s24 = ssub.s32 %s18, 2
      %s25 = sadd.s32 %s18, 1
      %s26 = ssub.s32 %s18, %s25
      %p27 = scmp.eq.s32.totalorder %s26, 0
      %s29 = sadd.s32 %s28, 1
      %s30 = scalar_select %p27, %s28, %s29
      %p33 = pneg %p27
      %p34 = scmp.eq.s32.totalorder %s18, 1
      %p35 = por %p33, %p34
      %p36 = scmp.ne.s32.totalorder %s28, %s31
      %p37 = scmp.eq.s32.totalorder %s18, 0
      %p38 = por %p36, %p37
      %p39 = scmp.ne.s32.totalorder %s28, %s31
      %p40 = scmp.eq.s32.totalorder %s23, 1
      %p41 = por %p39, %p40
      %p42 = scmp.ne.s32.totalorder %s31, %s32
      %p43 = scmp.eq.s32.totalorder %s23, 0
      %p44 = por %p42, %p43
      %p45 = scmp.ne.s32.totalorder %s31, %s32
      %p46 = scmp.eq.s32.totalorder %s24, 1
      %p47 = por %p45, %p46
      %p49 = scmp.ne.s32.totalorder %s32, %s48
      %p50 = scmp.eq.s32.totalorder %s24, 0
      %p51 = por %p49, %p50
      %s53 = sadd.s32 %s52, 1
      %p56 = scmp.eq.s32.totalorder %s18, 1
      %p57 = scmp.ne.s32.totalorder %s52, %s54
      %p58 = scmp.eq.s32.totalorder %s18, 0
      %p59 = por %p57, %p58
      %p60 = scmp.ne.s32.totalorder %s52, %s54
      %p61 = scmp.eq.s32.totalorder %s23, 1
      %p62 = por %p60, %p61
      %p63 = scmp.ne.s32.totalorder %s54, %s55
      %p64 = scmp.eq.s32.totalorder %s23, 0
      %p65 = por %p63, %p64
      %p66 = scmp.ne.s32.totalorder %s54, %s55
      %p67 = scmp.eq.s32.totalorder %s24, 1
      %p68 = por %p66, %p67
      %p70 = scmp.ne.s32.totalorder %s55, %s69
      %p71 = scmp.eq.s32.totalorder %s24, 0
      %p72 = por %p70, %p71
      %s74 = sadd.s32 %s73, 1
      %p77 = scmp.eq.s32.totalorder %s18, 1
      %p78 = scmp.ne.s32.totalorder %s73, %s75
      %p79 = scmp.eq.s32.totalorder %s18, 0
      %p80 = por %p78, %p79
      %p81 = scmp.ne.s32.totalorder %s73, %s75
      %p82 = scmp.eq.s32.totalorder %s23, 1
      %p83 = por %p81, %p82
      %p84 = scmp.ne.s32.totalorder %s75, %s76
      %p85 = scmp.eq.s32.totalorder %s23, 0
      %p86 = por %p84, %p85
      %p87 = scmp.ne.s32.totalorder %s75, %s76
      %p88 = scmp.eq.s32.totalorder %s24, 1
      %p89 = por %p87, %p88
      %p91 = scmp.ne.s32.totalorder %s76, %s90
      %p92 = scmp.eq.s32.totalorder %s24, 0
      %p93 = por %p91, %p92
      %s95 = sadd.s32 %s94, 1
      %p98 = scmp.eq.s32.totalorder %s18, 1
      %p99 = scmp.ne.s32.totalorder %s94, %s96
      %p100 = scmp.eq.s32.totalorder %s18, 0
      %p101 = por %p99, %p100
      %p102 = scmp.ne.s32.totalorder %s94, %s96
      %p103 = scmp.eq.s32.totalorder %s23, 1
      %p104 = por %p102, %p103
      %p105 = scmp.ne.s32.totalorder %s96, %s97
      %p106 = scmp.eq.s32.totalorder %s23, 0
      %p107 = por %p105, %p106
      %p108 = scmp.ne.s32.totalorder %s96, %s97
      %p109 = scmp.eq.s32.totalorder %s24, 1
      %p110 = por %p108, %p109
      %p112 = scmp.ne.s32.totalorder %s97, %s111
      %p113 = scmp.eq.s32.totalorder %s24, 0
      %p114 = por %p112, %p113
      %s116 = sadd.s32 %s115, 1
      %p119 = scmp.eq.s32.totalorder %s18, 1
      %p120 = scmp.ne.s32.totalorder %s115, %s117
      %p121 = scmp.eq.s32.totalorder %s18, 0
      %p122 = por %p120, %p121
      %p123 = scmp.ne.s32.totalorder %s115, %s117
      %p124 = scmp.eq.s32.totalorder %s23, 1
      %p125 = por %p123, %p124
      %p126 = scmp.ne.s32.totalorder %s117, %s118
      %p127 = scmp.eq.s32.totalorder %s23, 0
      %p128 = por %p126, %p127
      %p129 = scmp.ne.s32.totalorder %s117, %s118
      %p130 = scmp.eq.s32.totalorder %s24, 1
      %p131 = por %p129, %p130
      %p133 = scmp.ne.s32.totalorder %s118, %s132
      %p134 = scmp.eq.s32.totalorder %s24, 0
      %p135 = por %p133, %p134
      %s137 = sadd.s32 %s136, 1
      %p140 = scmp.eq.s32.totalorder %s18, 1
      %p141 = scmp.ne.s32.totalorder %s136, %s138
      %p142 = scmp.eq.s32.totalorder %s18, 0
      %p143 = por %p141, %p142
      %p144 = scmp.ne.s32.totalorder %s136, %s138
      %p145 = scmp.eq.s32.totalorder %s23, 1
      %p146 = por %p144, %p145
      %p147 = scmp.ne.s32.totalorder %s138, %s139
      %p148 = scmp.eq.s32.totalorder %s23, 0
      %p149 = por %p147, %p148
      %p150 = scmp.ne.s32.totalorder %s138, %s139
      %p151 = scmp.eq.s32.totalorder %s24, 1
      %p152 = por %p150, %p151
      %p154 = scmp.ne.s32.totalorder %s139, %s153
      %p155 = scmp.eq.s32.totalorder %s24, 0
      %p156 = por %p154, %p155
      %s158 = sadd.s32 %s157, 1
      %p161 = scmp.eq.s32.totalorder %s18, 1
      %p162 = scmp.ne.s32.totalorder %s157, %s159
      %p163 = scmp.eq.s32.totalorder %s18, 0
      %p164 = por %p162, %p163
      %p165 = scmp.ne.s32.totalorder %s157, %s159
      %p166 = scmp.eq.s32.totalorder %s23, 1
      %p167 = por %p165, %p166
      %p168 = scmp.ne.s32.totalorder %s159, %s160
      %p169 = scmp.eq.s32.totalorder %s23, 0
      %p170 = por %p168, %p169
      %p171 = scmp.ne.s32.totalorder %s159, %s160
      %p172 = scmp.eq.s32.totalorder %s24, 1
      %p173 = por %p171, %p172
      %p175 = scmp.ne.s32.totalorder %s160, %s174
      %p176 = scmp.eq.s32.totalorder %s24, 0
      %p177 = por %p175, %p176
      %s179 = sadd.s32 %s178, 1
      %p182 = scmp.eq.s32.totalorder %s18, 1
      %p183 = scmp.ne.s32.totalorder %s178, %s180
      %p184 = scmp.eq.s32.totalorder %s18, 0
      %p185 = por %p183, %p184
      %p186 = scmp.ne.s32.totalorder %s178, %s180
      %p187 = scmp.eq.s32.totalorder %s23, 1
      %p188 = por %p186, %p187
      %p189 = scmp.ne.s32.totalorder %s180, %s181
      %p190 = scmp.eq.s32.totalorder %s23, 0
      %p191 = por %p189, %p190
      %p192 = scmp.ne.s32.totalorder %s180, %s181
      %p193 = scmp.eq.s32.totalorder %s24, 1
      %p194 = por %p192, %p193
      %p196 = scmp.ne.s32.totalorder %s181, %s195
      %p197 = scmp.eq.s32.totalorder %s24, 0
      %p198 = por %p196, %p197
      %s200 = sadd.s32 %s199, 1
      %p203 = scmp.eq.s32.totalorder %s18, 1
      %p204 = scmp.ne.s32.totalorder %s199, %s201
      %p205 = scmp.eq.s32.totalorder %s18, 0
      %p206 = por %p204, %p205
      %p207 = scmp.ne.s32.totalorder %s199, %s201
      %p208 = scmp.eq.s32.totalorder %s23, 1
      %p209 = por %p207, %p208
      %p210 = scmp.ne.s32.totalorder %s201, %s202
      %p211 = scmp.eq.s32.totalorder %s23, 0
      %p212 = por %p210, %p211
      %p213 = scmp.ne.s32.totalorder %s201, %s202
      %p214 = scmp.eq.s32.totalorder %s24, 1
      %p215 = por %p213, %p214
      %p217 = scmp.ne.s32.totalorder %s202, %s216
      %p218 = scmp.eq.s32.totalorder %s24, 0
      %p219 = por %p217, %p218
      %s220 = ssub.s32 %s18, %s25
      %p221 = scmp.eq.s32.totalorder %s220, 0
      %s223 = sadd.s32 %s222, 1
      %s224 = scalar_select %p221, %s222, %s223
      %p227 = pneg %p221
      %p228 = scmp.eq.s32.totalorder %s18, 1
      %p229 = por %p227, %p228
      %p230 = scmp.ne.s32.totalorder %s222, %s225
      %p231 = scmp.eq.s32.totalorder %s18, 0
      %p232 = por %p230, %p231
      %p233 = scmp.ne.s32.totalorder %s222, %s225
      %p234 = scmp.eq.s32.totalorder %s23, 1
      %p235 = por %p233, %p234
      %p236 = scmp.ne.s32.totalorder %s225, %s226
      %p237 = scmp.eq.s32.totalorder %s23, 0
      %p238 = por %p236, %p237
      %p239 = scmp.ne.s32.totalorder %s225, %s226
      %p240 = scmp.eq.s32.totalorder %s24, 1
      %p241 = por %p239, %p240
      %p243 = scmp.ne.s32.totalorder %s226, %s242
      %p244 = scmp.eq.s32.totalorder %s24, 0
      %p245 = por %p243, %p244
      %p246 = scmp.le.s32.totalorder 1, %s18
      %p247 = scmp.lt.s32.totalorder %s18, 3
      %p248 = pnand %p246, %p247
      %p249 = pneg %p248
      // Predicated region
      $region9: #{tpu_custom_call.1} parent=5 // pred_check
        _
      $region10: #{tpu_custom_call.1} parent=5 // pred_check_branch
        %251 = sbr.rel (%p248) target = $region12
      $region11: #{tpu_custom_call.1} parent=5 // pred_region
        %s252 = ssub.s32 %s18, 1
        // Predicated region
        $region13: #{tpu_custom_call.1} parent=11 // pred_check
          %p253 = pneg %p65
        $region14: #{tpu_custom_call.1} parent=11 // pred_check_branch
          %255 = sbr.rel (%p253) target = $region16
        $region15: #{tpu_custom_call.1} parent=11 // pred_region
          _
        $region16: #{tpu_custom_call.1} parent=11 // pred_fallthru
          _
        // Predicated region
        $region17: #{tpu_custom_call.1} parent=11 // pred_check
          %p256 = pneg %p86
        $region18: #{tpu_custom_call.1} parent=11 // pred_check_branch
          %258 = sbr.rel (%p256) target = $region20
        $region19: #{tpu_custom_call.1} parent=11 // pred_region
          _
        $region20: #{tpu_custom_call.1} parent=11 // pred_fallthru
          _
        // Predicated region
        $region21: #{tpu_custom_call.1} parent=11 // pred_check
          %p259 = pneg %p107
        $region22: #{tpu_custom_call.1} parent=11 // pred_check_branch
          %261 = sbr.rel (%p259) target = $region24
        $region23: #{tpu_custom_call.1} parent=11 // pred_region
          _
        $region24: #{tpu_custom_call.1} parent=11 // pred_fallthru
          _
        // Predicated region
        $region25: #{tpu_custom_call.1} parent=11 // pred_check
          %p262 = pneg %p128
        $region26: #{tpu_custom_call.1} parent=11 // pred_check_branch
          %264 = sbr.rel (%p262) target = $region28
        $region27: #{tpu_custom_call.1} parent=11 // pred_region
          _
        $region28: #{tpu_custom_call.1} parent=11 // pred_fallthru
          _
        // Predicated region
        $region29: #{tpu_custom_call.1} parent=11 // pred_check
          %p265 = pneg %p149
        $region30: #{tpu_custom_call.1} parent=11 // pred_check_branch
          %267 = sbr.rel (%p265) target = $region32
        $region31: #{tpu_custom_call.1} parent=11 // pred_region
          _
        $region32: #{tpu_custom_call.1} parent=11 // pred_fallthru
          _
        // Predicated region
        $region33: #{tpu_custom_call.1} parent=11 // pred_check
          %p268 = pneg %p170
        $region34: #{tpu_custom_call.1} parent=11 // pred_check_branch
          %270 = sbr.rel (%p268) target = $region36
        $region35: #{tpu_custom_call.1} parent=11 // pred_region
          _
        $region36: #{tpu_custom_call.1} parent=11 // pred_fallthru
          _
        // Predicated region
        $region37: #{tpu_custom_call.1} parent=11 // pred_check
          %p271 = pneg %p191
        $region38: #{tpu_custom_call.1} parent=11 // pred_check_branch
          %273 = sbr.rel (%p271) target = $region40
        $region39: #{tpu_custom_call.1} parent=11 // pred_region
          _
        $region40: #{tpu_custom_call.1} parent=11 // pred_fallthru
          _
        // Predicated region
        $region41: #{tpu_custom_call.1} parent=11 // pred_check
          %p274 = pneg %p212
        $region42: #{tpu_custom_call.1} parent=11 // pred_check_branch
          %276 = sbr.rel (%p274) target = $region44
        $region43: #{tpu_custom_call.1} parent=11 // pred_region
          _
        $region44: #{tpu_custom_call.1} parent=11 // pred_fallthru
          _
      $region12: #{tpu_custom_call.1} parent=5 // pred_fallthru
        _
      %p277 = scmp.lt.s32.totalorder %s18, 2
      // Predicated region
      $region45: #{tpu_custom_call.1} parent=5 // pred_check
        %p278 = pneg %p277
      $region46: #{tpu_custom_call.1} parent=5 // pred_check_branch
        %280 = sbr.rel (%p278) target = $region48
      $region47: #{tpu_custom_call.1} parent=5 // pred_region
        // Predicated region
        $region49: #{tpu_custom_call.1} parent=47 // pred_check
          %p281 = pneg %p38
        $region50: #{tpu_custom_call.1} parent=47 // pred_check_branch
          %283 = sbr.rel (%p281) target = $region52
        $region51: #{tpu_custom_call.1} parent=47 // pred_region
          %p284 = scmp.lt.s32.totalorder %s18, 1
          %s285 = scalar_select %p284, %s18, 1
          %s286 = smul.addr %s285, 8
          %s287 = scalar_lea.vmem %s0, %s286
        $region52: #{tpu_custom_call.1} parent=47 // pred_fallthru
          _
      $region48: #{tpu_custom_call.1} parent=5 // pred_fallthru
        _
      %p288 = scmp.le.s32.totalorder 1, %s18
      %p289 = scmp.lt.s32.totalorder %s18, 3
      %p290 = pnand %p288, %p289
      %p291 = pneg %p290
      // Predicated region
      $region53: #{tpu_custom_call.1} parent=5 // pred_check
        _
      $region54: #{tpu_custom_call.1} parent=5 // pred_check_branch
        %293 = sbr.rel (%p290) target = $region56
      $region55: #{tpu_custom_call.1} parent=5 // pred_region
        %s294 = ssub.s32 %s18, 1
        %p295 = scmp.lt.s32.totalorder %s23, 1
        %s296 = scalar_select %p295, %s23, 1
        %s297 = smul.addr %s296, 8
        %s298 = scalar_lea.vmem %s0, %s297
        %p299 = pneg %p44
        %p300 = pneg %p41
        %p301 = pneg %p65
        %p302 = pneg %p62
        %p303 = pneg %p86
        %p304 = pneg %p83
        %p305 = pneg %p107
        %p306 = pneg %p104
        %p307 = pneg %p128
        %p308 = pneg %p125
        %p309 = pneg %p149
        %p310 = pneg %p146
        %p311 = pneg %p170
        %p312 = pneg %p167
        %p313 = pneg %p191
        %p314 = pneg %p188
        %p315 = pneg %p212
        %p316 = pneg %p209
        %p317 = pneg %p238
        %p318 = pneg %p235
        %s319 = sand.u32 %s225, 1
        %s320 = scalar_lea.sflag [#allocation3], %s319
        %s321 = sand.u32 %s225, 1
        %s322 = smul.addr %s321, 8
        %s323 = scalar_lea.vmem [#allocation2], %s322
        %p324 = scmp.lt.s32.totalorder %s23, 1
        %s325 = scalar_select %p324, %s23, 1
        %s326 = smul.addr %s325, 8
        %s327 = scalar_lea.vmem %s0, %s326
        %v329 = vld [vmem:[%s327] sm:$0xff]
        %v330 = vpack.c.bf16 %v329, %v329
        %v331 = vld [vmem:[%s1] sm:$0xf]
        %v332 = vld [vmem:[%s1 + $0x4] sm:$0xf]
        %v333 = vld [vmem:[%s1 + $0x8] sm:$0xf]
        %v334 = vld [vmem:[%s1 + $0xc] sm:$0xf]
        %v335 = vld [vmem:[%s1 + $0x10] sm:$0xf]
        %v336 = vld [vmem:[%s1 + $0x14] sm:$0xf]
        %v337 = vld [vmem:[%s1 + $0x18] sm:$0xf]
        %v338 = vld [vmem:[%s1 + $0x1c] sm:$0xf]
        %v339 = vld [vmem:[%s1 + $0x20] sm:$0xf]
        %v340 = vld [vmem:[%s1 + $0x24] sm:$0xf]
        %v341 = vld [vmem:[%s1 + $0x28] sm:$0xf]
        %v342 = vld [vmem:[%s1 + $0x2c] sm:$0xf]
        %v343 = vld [vmem:[%s1 + $0x30] sm:$0xf]
        %v344 = vld [vmem:[%s1 + $0x34] sm:$0xf]
        %v345 = vld [vmem:[%s1 + $0x38] sm:$0xf]
        %v346 = vld [vmem:[%s1 + $0x3c] sm:$0xf]
        %v347 = vld [vmem:[%s1 + $0x40] sm:$0xf]
        %v348 = vld [vmem:[%s1 + $0x44] sm:$0xf]
        %v349 = vld [vmem:[%s1 + $0x48] sm:$0xf]
        %v350 = vld [vmem:[%s1 + $0x4c] sm:$0xf]
        %v351 = vld [vmem:[%s1 + $0x50] sm:$0xf]
        %v352 = vld [vmem:[%s1 + $0x54] sm:$0xf]
        %v353 = vld [vmem:[%s1 + $0x58] sm:$0xf]
        %v354 = vld [vmem:[%s1 + $0x5c] sm:$0xf]
        %v355 = vld [vmem:[%s1 + $0x60] sm:$0xf]
        %v356 = vld [vmem:[%s1 + $0x64] sm:$0xf]
        %v357 = vld [vmem:[%s1 + $0x68] sm:$0xf]
        %v358 = vld [vmem:[%s1 + $0x6c] sm:$0xf]
        %v359 = vld [vmem:[%s1 + $0x70] sm:$0xf]
        %v360 = vld [vmem:[%s1 + $0x74] sm:$0xf]
        %v361 = vld [vmem:[%s1 + $0x78] sm:$0xf]
        %v362 = vld [vmem:[%s1 + $0x7c] sm:$0xf]
        %v363 = vld [vmem:[%s1 + $0x80] sm:$0xf]
        %v364 = vld [vmem:[%s1 + $0x84] sm:$0xf]
        %v365 = vld [vmem:[%s1 + $0x88] sm:$0xf]
        %v366 = vld [vmem:[%s1 + $0x8c] sm:$0xf]
        %v367 = vld [vmem:[%s1 + $0x90] sm:$0xf]
        %v368 = vld [vmem:[%s1 + $0x94] sm:$0xf]
        %v369 = vld [vmem:[%s1 + $0x98] sm:$0xf]
        %v370 = vld [vmem:[%s1 + $0x9c] sm:$0xf]
        %v371 = vld [vmem:[%s1 + $0xa0] sm:$0xf]
        %v372 = vld [vmem:[%s1 + $0xa4] sm:$0xf]
        %v373 = vld [vmem:[%s1 + $0xa8] sm:$0xf]
        %v374 = vld [vmem:[%s1 + $0xac] sm:$0xf]
        %v375 = vld [vmem:[%s1 + $0xb0] sm:$0xf]
        %v376 = vld [vmem:[%s1 + $0xb4] sm:$0xf]
        %v377 = vld [vmem:[%s1 + $0xb8] sm:$0xf]
        %v378 = vld [vmem:[%s1 + $0xbc] sm:$0xf]
        %v379 = vld [vmem:[%s1 + $0xc0] sm:$0xf]
        %v380 = vld [vmem:[%s1 + $0xc4] sm:$0xf]
        %v381 = vld [vmem:[%s1 + $0xc8] sm:$0xf]
        %v382 = vld [vmem:[%s1 + $0xcc] sm:$0xf]
        %v383 = vld [vmem:[%s1 + $0xd0] sm:$0xf]
        %v384 = vld [vmem:[%s1 + $0xd4] sm:$0xf]
        %v385 = vld [vmem:[%s1 + $0xd8] sm:$0xf]
        %v386 = vld [vmem:[%s1 + $0xdc] sm:$0xf]
        %v387 = vld [vmem:[%s1 + $0xe0] sm:$0xf]
        %v388 = vld [vmem:[%s1 + $0xe4] sm:$0xf]
        %v389 = vld [vmem:[%s1 + $0xe8] sm:$0xf]
        %v390 = vld [vmem:[%s1 + $0xec] sm:$0xf]
        %v391 = vld [vmem:[%s1 + $0xf0] sm:$0xf]
        %v392 = vld [vmem:[%s1 + $0xf4] sm:$0xf]
        %v393 = vld [vmem:[%s1 + $0xf8] sm:$0xf]
        %v394 = vld [vmem:[%s1 + $0xfc] sm:$0xf]
        %v395 = vld [vmem:[%s5] sm:$0x1]
        %v396 = vld [vmem:[%s5 + $0x1] sm:$0x1]
        %v397 = vld [vmem:[%s5 + $0x2] sm:$0x1]
        %v398 = vld [vmem:[%s5 + $0x3] sm:$0x1]
        %v403 = vlaneseq
        %v404 = vshrl.u32 %v403, 7
        %v405 = vsub.s32 0, %v404
        %v406 = vrot.slane %v395, %v405
        %v407 = vlaneseq
        %v408 = vshrl.u32 %v407, 7
        %v409 = vsub.s32 0, %v408
        %v410 = vrot.slane %v396, %v409
        %v411 = vlaneseq
        %v412 = vshrl.u32 %v411, 7
        %v413 = vsub.s32 0, %v412
        %v414 = vrot.slane %v397, %v413
        %v415 = vlaneseq
        %v416 = vshrl.u32 %v415, 7
        %v417 = vsub.s32 0, %v416
        %v418 = vrot.slane %v398, %v417
        %v439 = vunpack.c.l.b16 %v331
        %v440 = vunpack.c.l.b16 %v332
        %v441 = vunpack.c.l.b16 %v333
        %v442 = vunpack.c.l.b16 %v334
        %v443 = vunpack.c.l.b16 %v335
        %v444 = vunpack.c.l.b16 %v336
        %v445 = vunpack.c.l.b16 %v337
        %v446 = vunpack.c.l.b16 %v338
        %v447 = vunpack.c.l.b16 %v339
        %v448 = vunpack.c.l.b16 %v340
        %v449 = vunpack.c.l.b16 %v341
        %v450 = vunpack.c.l.b16 %v342
        %v451 = vunpack.c.l.b16 %v343
        %v452 = vunpack.c.l.b16 %v344
        %v453 = vunpack.c.l.b16 %v345
        %v454 = vunpack.c.l.b16 %v346
        %v455 = vpack.c.b16 %v440, %v439
        %v456 = vpack.c.b16 %v442, %v441
        %v457 = vpack.c.b16 %v444, %v443
        %v458 = vpack.c.b16 %v446, %v445
        %v459 = vpack.c.b16 %v448, %v447
        %v460 = vpack.c.b16 %v450, %v449
        %v461 = vpack.c.b16 %v452, %v451
        %v462 = vpack.c.b16 %v454, %v453
        %471 = vmatprep.subr.bf16.mxu0 0
        %472 = vmatpush1.bf16.msra.mxu0 %v455
        %473 = vmatprep.subr.bf16.mxu0 0
        %474 = vmatpush1.bf16.msra.mxu0 %v456
        %475 = vmatprep.subr.bf16.mxu0 0
        %476 = vmatpush1.bf16.msra.mxu0 %v457
        %477 = vmatprep.subr.bf16.mxu0 0
        %478 = vmatpush1.bf16.msra.mxu0 %v458
        %479 = vmatprep.subr.bf16.mxu0 0
        %480 = vmatpush1.bf16.msra.mxu0 %v459
        %481 = vmatprep.subr.bf16.mxu0 0
        %482 = vmatpush1.bf16.msra.mxu0 %v460
        %483 = vmatprep.subr.bf16.mxu0 0
        %484 = vmatpush1.bf16.msra.mxu0 %v461
        %485 = vmatprep.subr.bf16.mxu0 0
        %486 = vmatpush1.bf16.msra.mxu0 %v462
        %487 = vmatprep.subr.bf16.mxu0 0
        %488 = vmatpush1.bf16.msra.mxu0 0
        %489 = vmatprep.subr.bf16.mxu0 0
        %490 = vmatpush1.bf16.msra.mxu0 0
        %491 = vmatprep.subr.bf16.mxu0 0
        %492 = vmatpush1.bf16.msra.mxu0 0
        %493 = vmatprep.subr.bf16.mxu0 0
        %494 = vmatpush1.bf16.msra.mxu0 0
        %495 = vmatprep.subr.bf16.mxu0 0
        %496 = vmatpush1.bf16.msra.mxu0 0
        %497 = vmatprep.subr.bf16.mxu0 0
        %498 = vmatpush1.bf16.msra.mxu0 0
        %499 = vmatprep.subr.bf16.mxu0 0
        %500 = vmatpush1.bf16.msra.mxu0 0
        %501 = vmatprep.subr.bf16.mxu0 0
        %502 = vmatpush1.bf16.msra.mxu0 0
        %503 = vmatprep.mubr.bf16.mxu0 0
        %504 = vmatmul.mubr.bf16.gmra.mrb[0].mxu0 %v330
        %v505 = vpop.f32.mrb[0].mxu0
        %v506 = vadd.f32 %v406, %v505
        %v507 = vpop.f32.mrb[0].mxu0
        %v508 = vpop.f32.mrb[0].mxu0
        %v509 = vpop.f32.mrb[0].mxu0
        %510 = vdwg.mxu0
        %v527 = vunpack.c.l.b16 %v347
        %v528 = vunpack.c.l.b16 %v348
        %v529 = vunpack.c.l.b16 %v349
        %v530 = vunpack.c.l.b16 %v350
        %v531 = vunpack.c.l.b16 %v351
        %v532 = vunpack.c.l.b16 %v352
        %v533 = vunpack.c.l.b16 %v353
        %v534 = vunpack.c.l.b16 %v354
        %v535 = vunpack.c.l.b16 %v355
        %v536 = vunpack.c.l.b16 %v356
        %v537 = vunpack.c.l.b16 %v357
        %v538 = vunpack.c.l.b16 %v358
        %v539 = vunpack.c.l.b16 %v359
        %v540 = vunpack.c.l.b16 %v360
        %v541 = vunpack.c.l.b16 %v361
        %v542 = vunpack.c.l.b16 %v362
        %v543 = vpack.c.b16 %v528, %v527
        %v544 = vpack.c.b16 %v530, %v529
        %v545 = vpack.c.b16 %v532, %v531
        %v546 = vpack.c.b16 %v534, %v533
        %v547 = vpack.c.b16 %v536, %v535
        %v548 = vpack.c.b16 %v538, %v537
        %v549 = vpack.c.b16 %v540, %v539
        %v550 = vpack.c.b16 %v542, %v541
        %559 = vmatprep.subr.bf16.mxu0 0
        %560 = vmatpush1.bf16.msra.mxu0 %v543
        %561 = vmatprep.subr.bf16.mxu0 0
        %562 = vmatpush1.bf16.msra.mxu0 %v544
        %563 = vmatprep.subr.bf16.mxu0 0
        %564 = vmatpush1.bf16.msra.mxu0 %v545
        %565 = vmatprep.subr.bf16.mxu0 0
        %566 = vmatpush1.bf16.msra.mxu0 %v546
        %567 = vmatprep.subr.bf16.mxu0 0
        %568 = vmatpush1.bf16.msra.mxu0 %v547
        %569 = vmatprep.subr.bf16.mxu0 0
        %570 = vmatpush1.bf16.msra.mxu0 %v548
        %571 = vmatprep.subr.bf16.mxu0 0
        %572 = vmatpush1.bf16.msra.mxu0 %v549
        %573 = vmatprep.subr.bf16.mxu0 0
        %574 = vmatpush1.bf16.msra.mxu0 %v550
        %575 = vmatprep.subr.bf16.mxu0 0
        %576 = vmatpush1.bf16.msra.mxu0 0
        %577 = vmatprep.subr.bf16.mxu0 0
        %578 = vmatpush1.bf16.msra.mxu0 0
        %579 = vmatprep.subr.bf16.mxu0 0
        %580 = vmatpush1.bf16.msra.mxu0 0
        %581 = vmatprep.subr.bf16.mxu0 0
        %582 = vmatpush1.bf16.msra.mxu0 0
        %583 = vmatprep.subr.bf16.mxu0 0
        %584 = vmatpush1.bf16.msra.mxu0 0
        %585 = vmatprep.subr.bf16.mxu0 0
        %586 = vmatpush1.bf16.msra.mxu0 0
        %587 = vmatprep.subr.bf16.mxu0 0
        %588 = vmatpush1.bf16.msra.mxu0 0
        %589 = vmatprep.subr.bf16.mxu0 0
        %590 = vmatpush1.bf16.msra.mxu0 0
        %591 = vmatprep.mubr.bf16.mxu0 0
        %592 = vmatmul.mubr.bf16.gmra.mrb[0].mxu0 %v330
        %v593 = vpop.f32.mrb[0].mxu0
        %v594 = vadd.f32 %v410, %v593
        %v595 = vpop.f32.mrb[0].mxu0
        %v596 = vpop.f32.mrb[0].mxu0
        %v597 = vpop.f32.mrb[0].mxu0
        %598 = vdwg.mxu0
        %v615 = vunpack.c.l.b16 %v363
        %v616 = vunpack.c.l.b16 %v364
        %v617 = vunpack.c.l.b16 %v365
        %v618 = vunpack.c.l.b16 %v366
        %v619 = vunpack.c.l.b16 %v367
        %v620 = vunpack.c.l.b16 %v368
        %v621 = vunpack.c.l.b16 %v369
        %v622 = vunpack.c.l.b16 %v370
        %v623 = vunpack.c.l.b16 %v371
        %v624 = vunpack.c.l.b16 %v372
        %v625 = vunpack.c.l.b16 %v373
        %v626 = vunpack.c.l.b16 %v374
        %v627 = vunpack.c.l.b16 %v375
        %v628 = vunpack.c.l.b16 %v376
        %v629 = vunpack.c.l.b16 %v377
        %v630 = vunpack.c.l.b16 %v378
        %v631 = vpack.c.b16 %v616, %v615
        %v632 = vpack.c.b16 %v618, %v617
        %v633 = vpack.c.b16 %v620, %v619
        %v634 = vpack.c.b16 %v622, %v621
        %v635 = vpack.c.b16 %v624, %v623
        %v636 = vpack.c.b16 %v626, %v625
        %v637 = vpack.c.b16 %v628, %v627
        %v638 = vpack.c.b16 %v630, %v629
        %647 = vmatprep.subr.bf16.mxu0 0
        %648 = vmatpush1.bf16.msra.mxu0 %v631
        %649 = vmatprep.subr.bf16.mxu0 0
        %650 = vmatpush1.bf16.msra.mxu0 %v632
        %651 = vmatprep.subr.bf16.mxu0 0
        %652 = vmatpush1.bf16.msra.mxu0 %v633
        %653 = vmatprep.subr.bf16.mxu0 0
        %654 = vmatpush1.bf16.msra.mxu0 %v634
        %655 = vmatprep.subr.bf16.mxu0 0
        %656 = vmatpush1.bf16.msra.mxu0 %v635
        %657 = vmatprep.subr.bf16.mxu0 0
        %658 = vmatpush1.bf16.msra.mxu0 %v636
        %659 = vmatprep.subr.bf16.mxu0 0
        %660 = vmatpush1.bf16.msra.mxu0 %v637
        %661 = vmatprep.subr.bf16.mxu0 0
        %662 = vmatpush1.bf16.msra.mxu0 %v638
        %663 = vmatprep.subr.bf16.mxu0 0
        %664 = vmatpush1.bf16.msra.mxu0 0
        %665 = vmatprep.subr.bf16.mxu0 0
        %666 = vmatpush1.bf16.msra.mxu0 0
        %667 = vmatprep.subr.bf16.mxu0 0
        %668 = vmatpush1.bf16.msra.mxu0 0
        %669 = vmatprep.subr.bf16.mxu0 0
        %670 = vmatpush1.bf16.msra.mxu0 0
        %671 = vmatprep.subr.bf16.mxu0 0
        %672 = vmatpush1.bf16.msra.mxu0 0
        %673 = vmatprep.subr.bf16.mxu0 0
        %674 = vmatpush1.bf16.msra.mxu0 0
        %675 = vmatprep.subr.bf16.mxu0 0
        %676 = vmatpush1.bf16.msra.mxu0 0
        %677 = vmatprep.subr.bf16.mxu0 0
        %678 = vmatpush1.bf16.msra.mxu0 0
        %679 = vmatprep.mubr.bf16.mxu0 0
        %680 = vmatmul.mubr.bf16.gmra.mrb[0].mxu0 %v330
        %v681 = vpop.f32.mrb[0].mxu0
        %v682 = vadd.f32 %v414, %v681
        %v683 = vpop.f32.mrb[0].mxu0
        %v684 = vpop.f32.mrb[0].mxu0
        %v685 = vpop.f32.mrb[0].mxu0
        %686 = vdwg.mxu0
        %v703 = vunpack.c.l.b16 %v379
        %v704 = vunpack.c.l.b16 %v380
        %v705 = vunpack.c.l.b16 %v381
        %v706 = vunpack.c.l.b16 %v382
        %v707 = vunpack.c.l.b16 %v383
        %v708 = vunpack.c.l.b16 %v384
        %v709 = vunpack.c.l.b16 %v385
        %v710 = vunpack.c.l.b16 %v386
        %v711 = vunpack.c.l.b16 %v387
        %v712 = vunpack.c.l.b16 %v388
        %v713 = vunpack.c.l.b16 %v389
        %v714 = vunpack.c.l.b16 %v390
        %v715 = vunpack.c.l.b16 %v391
        %v716 = vunpack.c.l.b16 %v392
        %v717 = vunpack.c.l.b16 %v393
        %v718 = vunpack.c.l.b16 %v394
        %v719 = vpack.c.b16 %v704, %v703
        %v720 = vpack.c.b16 %v706, %v705
        %v721 = vpack.c.b16 %v708, %v707
        %v722 = vpack.c.b16 %v710, %v709
        %v723 = vpack.c.b16 %v712, %v711
        %v724 = vpack.c.b16 %v714, %v713
        %v725 = vpack.c.b16 %v716, %v715
        %v726 = vpack.c.b16 %v718, %v717
        %735 = vmatprep.subr.bf16.mxu0 0
        %736 = vmatpush1.bf16.msra.mxu0 %v719
        %737 = vmatprep.subr.bf16.mxu0 0
        %738 = vmatpush1.bf16.msra.mxu0 %v720
        %739 = vmatprep.subr.bf16.mxu0 0
        %740 = vmatpush1.bf16.msra.mxu0 %v721
        %741 = vmatprep.subr.bf16.mxu0 0
        %742 = vmatpush1.bf16.msra.mxu0 %v722
        %743 = vmatprep.subr.bf16.mxu0 0
        %744 = vmatpush1.bf16.msra.mxu0 %v723
        %745 = vmatprep.subr.bf16.mxu0 0
        %746 = vmatpush1.bf16.msra.mxu0 %v724
        %747 = vmatprep.subr.bf16.mxu0 0
        %748 = vmatpush1.bf16.msra.mxu0 %v725
        %749 = vmatprep.subr.bf16.mxu0 0
        %750 = vmatpush1.bf16.msra.mxu0 %v726
        %751 = vmatprep.subr.bf16.mxu0 0
        %752 = vmatpush1.bf16.msra.mxu0 0
        %753 = vmatprep.subr.bf16.mxu0 0
        %754 = vmatpush1.bf16.msra.mxu0 0
        %755 = vmatprep.subr.bf16.mxu0 0
        %756 = vmatpush1.bf16.msra.mxu0 0
        %757 = vmatprep.subr.bf16.mxu0 0
        %758 = vmatpush1.bf16.msra.mxu0 0
        %759 = vmatprep.subr.bf16.mxu0 0
        %760 = vmatpush1.bf16.msra.mxu0 0
        %761 = vmatprep.subr.bf16.mxu0 0
        %762 = vmatpush1.bf16.msra.mxu0 0
        %763 = vmatprep.subr.bf16.mxu0 0
        %764 = vmatpush1.bf16.msra.mxu0 0
        %765 = vmatprep.subr.bf16.mxu0 0
        %766 = vmatpush1.bf16.msra.mxu0 0
        %767 = vmatprep.mubr.bf16.mxu0 0
        %768 = vmatmul.mubr.bf16.gmra.mrb[0].mxu0 %v330
        %v769 = vpop.f32.mrb[0].mxu0
        %v770 = vadd.f32 %v418, %v769
        %v771 = vpop.f32.mrb[0].mxu0
        %v772 = vpop.f32.mrb[0].mxu0
        %v773 = vpop.f32.mrb[0].mxu0
        %774 = vdwg.mxu0
        %v775 = vld [vmem:[%s2] sm:$0xf]
        %v776 = vld [vmem:[%s2 + $0x4] sm:$0xf]
        %v777 = vld [vmem:[%s2 + $0x8] sm:$0xf]
        %v778 = vld [vmem:[%s2 + $0xc] sm:$0xf]
        %v779 = vld [vmem:[%s2 + $0x10] sm:$0xf]
        %v780 = vld [vmem:[%s2 + $0x14] sm:$0xf]
        %v781 = vld [vmem:[%s2 + $0x18] sm:$0xf]
        %v782 = vld [vmem:[%s2 + $0x1c] sm:$0xf]
        %v783 = vld [vmem:[%s2 + $0x20] sm:$0xf]
        %v784 = vld [vmem:[%s2 + $0x24] sm:$0xf]
        %v785 = vld [vmem:[%s2 + $0x28] sm:$0xf]
        %v786 = vld [vmem:[%s2 + $0x2c] sm:$0xf]
        %v787 = vld [vmem:[%s2 + $0x30] sm:$0xf]
        %v788 = vld [vmem:[%s2 + $0x34] sm:$0xf]
        %v789 = vld [vmem:[%s2 + $0x38] sm:$0xf]
        %v790 = vld [vmem:[%s2 + $0x3c] sm:$0xf]
        %v791 = vld [vmem:[%s2 + $0x40] sm:$0xf]
        %v792 = vld [vmem:[%s2 + $0x44] sm:$0xf]
        %v793 = vld [vmem:[%s2 + $0x48] sm:$0xf]
        %v794 = vld [vmem:[%s2 + $0x4c] sm:$0xf]
        %v795 = vld [vmem:[%s2 + $0x50] sm:$0xf]
        %v796 = vld [vmem:[%s2 + $0x54] sm:$0xf]
        %v797 = vld [vmem:[%s2 + $0x58] sm:$0xf]
        %v798 = vld [vmem:[%s2 + $0x5c] sm:$0xf]
        %v799 = vld [vmem:[%s2 + $0x60] sm:$0xf]
        %v800 = vld [vmem:[%s2 + $0x64] sm:$0xf]
        %v801 = vld [vmem:[%s2 + $0x68] sm:$0xf]
        %v802 = vld [vmem:[%s2 + $0x6c] sm:$0xf]
        %v803 = vld [vmem:[%s2 + $0x70] sm:$0xf]
        %v804 = vld [vmem:[%s2 + $0x74] sm:$0xf]
        %v805 = vld [vmem:[%s2 + $0x78] sm:$0xf]
        %v806 = vld [vmem:[%s2 + $0x7c] sm:$0xf]
        %v807 = vld [vmem:[%s2 + $0x80] sm:$0xf]
        %v808 = vld [vmem:[%s2 + $0x84] sm:$0xf]
        %v809 = vld [vmem:[%s2 + $0x88] sm:$0xf]
        %v810 = vld [vmem:[%s2 + $0x8c] sm:$0xf]
        %v811 = vld [vmem:[%s2 + $0x90] sm:$0xf]
        %v812 = vld [vmem:[%s2 + $0x94] sm:$0xf]
        %v813 = vld [vmem:[%s2 + $0x98] sm:$0xf]
        %v814 = vld [vmem:[%s2 + $0x9c] sm:$0xf]
        %v815 = vld [vmem:[%s2 + $0xa0] sm:$0xf]
        %v816 = vld [vmem:[%s2 + $0xa4] sm:$0xf]
        %v817 = vld [vmem:[%s2 + $0xa8] sm:$0xf]
        %v818 = vld [vmem:[%s2 + $0xac] sm:$0xf]
        %v819 = vld [vmem:[%s2 + $0xb0] sm:$0xf]
        %v820 = vld [vmem:[%s2 + $0xb4] sm:$0xf]
        %v821 = vld [vmem:[%s2 + $0xb8] sm:$0xf]
        %v822 = vld [vmem:[%s2 + $0xbc] sm:$0xf]
        %v823 = vld [vmem:[%s2 + $0xc0] sm:$0xf]
        %v824 = vld [vmem:[%s2 + $0xc4] sm:$0xf]
        %v825 = vld [vmem:[%s2 + $0xc8] sm:$0xf]
        %v826 = vld [vmem:[%s2 + $0xcc] sm:$0xf]
        %v827 = vld [vmem:[%s2 + $0xd0] sm:$0xf]
        %v828 = vld [vmem:[%s2 + $0xd4] sm:$0xf]
        %v829 = vld [vmem:[%s2 + $0xd8] sm:$0xf]
        %v830 = vld [vmem:[%s2 + $0xdc] sm:$0xf]
        %v831 = vld [vmem:[%s2 + $0xe0] sm:$0xf]
        %v832 = vld [vmem:[%s2 + $0xe4] sm:$0xf]
        %v833 = vld [vmem:[%s2 + $0xe8] sm:$0xf]
        %v834 = vld [vmem:[%s2 + $0xec] sm:$0xf]
        %v835 = vld [vmem:[%s2 + $0xf0] sm:$0xf]
        %v836 = vld [vmem:[%s2 + $0xf4] sm:$0xf]
        %v837 = vld [vmem:[%s2 + $0xf8] sm:$0xf]
        %v838 = vld [vmem:[%s2 + $0xfc] sm:$0xf]
        %v839 = vld [vmem:[%s6] sm:$0x1]
        %v840 = vld [vmem:[%s6 + $0x1] sm:$0x1]
        %v841 = vld [vmem:[%s6 + $0x2] sm:$0x1]
        %v842 = vld [vmem:[%s6 + $0x3] sm:$0x1]
        %v847 = vlaneseq
        %v848 = vshrl.u32 %v847, 7
        %v849 = vsub.s32 0, %v848
        %v850 = vrot.slane %v839, %v849
        %v851 = vlaneseq
        %v852 = vshrl.u32 %v851, 7
        %v853 = vsub.s32 0, %v852
        %v854 = vrot.slane %v840, %v853
        %v855 = vlaneseq
        %v856 = vshrl.u32 %v855, 7
        %v857 = vsub.s32 0, %v856
        %v858 = vrot.slane %v841, %v857
        %v859 = vlaneseq
        %v860 = vshrl.u32 %v859, 7
        %v861 = vsub.s32 0, %v860
        %v862 = vrot.slane %v842, %v861
        %v883 = vunpack.c.l.b16 %v775
        %v884 = vunpack.c.l.b16 %v776
        %v885 = vunpack.c.l.b16 %v777
        %v886 = vunpack.c.l.b16 %v778
        %v887 = vunpack.c.l.b16 %v779
        %v888 = vunpack.c.l.b16 %v780
        %v889 = vunpack.c.l.b16 %v781
        %v890 = vunpack.c.l.b16 %v782
        %v891 = vunpack.c.l.b16 %v783
        %v892 = vunpack.c.l.b16 %v784
        %v893 = vunpack.c.l.b16 %v785
        %v894 = vunpack.c.l.b16 %v786
        %v895 = vunpack.c.l.b16 %v787
        %v896 = vunpack.c.l.b16 %v788
        %v897 = vunpack.c.l.b16 %v789
        %v898 = vunpack.c.l.b16 %v790
        %v899 = vpack.c.b16 %v884, %v883
        %v900 = vpack.c.b16 %v886, %v885
        %v901 = vpack.c.b16 %v888, %v887
        %v902 = vpack.c.b16 %v890, %v889
        %v903 = vpack.c.b16 %v892, %v891
        %v904 = vpack.c.b16 %v894, %v893
        %v905 = vpack.c.b16 %v896, %v895
        %v906 = vpack.c.b16 %v898, %v897
        %915 = vmatprep.subr.bf16.mxu0 0
        %916 = vmatpush1.bf16.msra.mxu0 %v899
        %917 = vmatprep.subr.bf16.mxu0 0
        %918 = vmatpush1.bf16.msra.mxu0 %v900
        %919 = vmatprep.subr.bf16.mxu0 0
        %920 = vmatpush1.bf16.msra.mxu0 %v901
        %921 = vmatprep.subr.bf16.mxu0 0
        %922 = vmatpush1.bf16.msra.mxu0 %v902
        %923 = vmatprep.subr.bf16.mxu0 0
        %924 = vmatpush1.bf16.msra.mxu0 %v903
        %925 = vmatprep.subr.bf16.mxu0 0
        %926 = vmatpush1.bf16.msra.mxu0 %v904
        %927 = vmatprep.subr.bf16.mxu0 0
        %928 = vmatpush1.bf16.msra.mxu0 %v905
        %929 = vmatprep.subr.bf16.mxu0 0
        %930 = vmatpush1.bf16.msra.mxu0 %v906
        %931 = vmatprep.subr.bf16.mxu0 0
        %932 = vmatpush1.bf16.msra.mxu0 0
        %933 = vmatprep.subr.bf16.mxu0 0
        %934 = vmatpush1.bf16.msra.mxu0 0
        %935 = vmatprep.subr.bf16.mxu0 0
        %936 = vmatpush1.bf16.msra.mxu0 0
        %937 = vmatprep.subr.bf16.mxu0 0
        %938 = vmatpush1.bf16.msra.mxu0 0
        %939 = vmatprep.subr.bf16.mxu0 0
        %940 = vmatpush1.bf16.msra.mxu0 0
        %941 = vmatprep.subr.bf16.mxu0 0
        %942 = vmatpush1.bf16.msra.mxu0 0
        %943 = vmatprep.subr.bf16.mxu0 0
        %944 = vmatpush1.bf16.msra.mxu0 0
        %945 = vmatprep.subr.bf16.mxu0 0
        %946 = vmatpush1.bf16.msra.mxu0 0
        %947 = vmatprep.mubr.bf16.mxu0 0
        %948 = vmatmul.mubr.bf16.gmra.mrb[0].mxu0 %v330
        %v949 = vpop.f32.mrb[0].mxu0
        %v950 = vadd.f32 %v850, %v949
        %v951 = vpop.f32.mrb[0].mxu0
        %v952 = vpop.f32.mrb[0].mxu0
        %v953 = vpop.f32.mrb[0].mxu0
        %954 = vdwg.mxu0
        %v971 = vunpack.c.l.b16 %v791
        %v972 = vunpack.c.l.b16 %v792
        %v973 = vunpack.c.l.b16 %v793
        %v974 = vunpack.c.l.b16 %v794
        %v975 = vunpack.c.l.b16 %v795
        %v976 = vunpack.c.l.b16 %v796
        %v977 = vunpack.c.l.b16 %v797
        %v978 = vunpack.c.l.b16 %v798
        %v979 = vunpack.c.l.b16 %v799
        %v980 = vunpack.c.l.b16 %v800
        %v981 = vunpack.c.l.b16 %v801
        %v982 = vunpack.c.l.b16 %v802
        %v983 = vunpack.c.l.b16 %v803
        %v984 = vunpack.c.l.b16 %v804
        %v985 = vunpack.c.l.b16 %v805
        %v986 = vunpack.c.l.b16 %v806
        %v987 = vpack.c.b16 %v972, %v971
        %v988 = vpack.c.b16 %v974, %v973
        %v989 = vpack.c.b16 %v976, %v975
        %v990 = vpack.c.b16 %v978, %v977
        %v991 = vpack.c.b16 %v980, %v979
        %v992 = vpack.c.b16 %v982, %v981
        %v993 = vpack.c.b16 %v984, %v983
        %v994 = vpack.c.b16 %v986, %v985
        %1003 = vmatprep.subr.bf16.mxu0 0
        %1004 = vmatpush1.bf16.msra.mxu0 %v987
        %1005 = vmatprep.subr.bf16.mxu0 0
        %1006 = vmatpush1.bf16.msra.mxu0 %v988
        %1007 = vmatprep.subr.bf16.mxu0 0
        %1008 = vmatpush1.bf16.msra.mxu0 %v989
        %1009 = vmatprep.subr.bf16.mxu0 0
        %1010 = vmatpush1.bf16.msra.mxu0 %v990
        %1011 = vmatprep.subr.bf16.mxu0 0
        %1012 = vmatpush1.bf16.msra.mxu0 %v991
        %1013 = vmatprep.subr.bf16.mxu0 0
        %1014 = vmatpush1.bf16.msra.mxu0 %v992
        %1015 = vmatprep.subr.bf16.mxu0 0
        %1016 = vmatpush1.bf16.msra.mxu0 %v993
        %1017 = vmatprep.subr.bf16.mxu0 0
        %1018 = vmatpush1.bf16.msra.mxu0 %v994
        %1019 = vmatprep.subr.bf16.mxu0 0
        %1020 = vmatpush1.bf16.msra.mxu0 0
        %1021 = vmatprep.subr.bf16.mxu0 0
        %1022 = vmatpush1.bf16.msra.mxu0 0
        %1023 = vmatprep.subr.bf16.mxu0 0
        %1024 = vmatpush1.bf16.msra.mxu0 0
        %1025 = vmatprep.subr.bf16.mxu0 0
        %1026 = vmatpush1.bf16.msra.mxu0 0
        %1027 = vmatprep.subr.bf16.mxu0 0
        %1028 = vmatpush1.bf16.msra.mxu0 0
        %1029 = vmatprep.subr.bf16.mxu0 0
        %1030 = vmatpush1.bf16.msra.mxu0 0
        %1031 = vmatprep.subr.bf16.mxu0 0
        %1032 = vmatpush1.bf16.msra.mxu0 0
        %1033 = vmatprep.subr.bf16.mxu0 0
        %1034 = vmatpush1.bf16.msra.mxu0 0
        %1035 = vmatprep.mubr.bf16.mxu0 0
        %1036 = vmatmul.mubr.bf16.gmra.mrb[0].mxu0 %v330
        %v1037 = vpop.f32.mrb[0].mxu0
        %v1038 = vadd.f32 %v854, %v1037
        %v1039 = vpop.f32.mrb[0].mxu0
        %v1040 = vpop.f32.mrb[0].mxu0
        %v1041 = vpop.f32.mrb[0].mxu0
        %1042 = vdwg.mxu0
        %v1059 = vunpack.c.l.b16 %v807
        %v1060 = vunpack.c.l.b16 %v808
        %v1061 = vunpack.c.l.b16 %v809
        %v1062 = vunpack.c.l.b16 %v810
        %v1063 = vunpack.c.l.b16 %v811
        %v1064 = vunpack.c.l.b16 %v812
        %v1065 = vunpack.c.l.b16 %v813
        %v1066 = vunpack.c.l.b16 %v814
        %v1067 = vunpack.c.l.b16 %v815
        %v1068 = vunpack.c.l.b16 %v816
        %v1069 = vunpack.c.l.b16 %v817
        %v1070 = vunpack.c.l.b16 %v818
        %v1071 = vunpack.c.l.b16 %v819
        %v1072 = vunpack.c.l.b16 %v820
        %v1073 = vunpack.c.l.b16 %v821
        %v1074 = vunpack.c.l.b16 %v822
        %v1075 = vpack.c.b16 %v1060, %v1059
        %v1076 = vpack.c.b16 %v1062, %v1061
        %v1077 = vpack.c.b16 %v1064, %v1063
        %v1078 = vpack.c.b16 %v1066, %v1065
        %v1079 = vpack.c.b16 %v1068, %v1067
        %v1080 = vpack.c.b16 %v1070, %v1069
        %v1081 = vpack.c.b16 %v1072, %v1071
        %v1082 = vpack.c.b16 %v1074, %v1073
        %1091 = vmatprep.subr.bf16.mxu0 0
        %1092 = vmatpush1.bf16.msra.mxu0 %v1075
        %1093 = vmatprep.subr.bf16.mxu0 0
        %1094 = vmatpush1.bf16.msra.mxu0 %v1076
        %1095 = vmatprep.subr.bf16.mxu0 0
        %1096 = vmatpush1.bf16.msra.mxu0 %v1077
        %1097 = vmatprep.subr.bf16.mxu0 0
        %1098 = vmatpush1.bf16.msra.mxu0 %v1078
        %1099 = vmatprep.subr.bf16.mxu0 0
        %1100 = vmatpush1.bf16.msra.mxu0 %v1079
        %1101 = vmatprep.subr.bf16.mxu0 0
        %1102 = vmatpush1.bf16.msra.mxu0 %v1080
        %1103 = vmatprep.subr.bf16.mxu0 0
        %1104 = vmatpush1.bf16.msra.mxu0 %v1081
        %1105 = vmatprep.subr.bf16.mxu0 0
        %1106 = vmatpush1.bf16.msra.mxu0 %v1082
        %1107 = vmatprep.subr.bf16.mxu0 0
        %1108 = vmatpush1.bf16.msra.mxu0 0
        %1109 = vmatprep.subr.bf16.mxu0 0
        %1110 = vmatpush1.bf16.msra.mxu0 0
        %1111 = vmatprep.subr.bf16.mxu0 0
        %1112 = vmatpush1.bf16.msra.mxu0 0
        %1113 = vmatprep.subr.bf16.mxu0 0
        %1114 = vmatpush1.bf16.msra.mxu0 0
        %1115 = vmatprep.subr.bf16.mxu0 0
        %1116 = vmatpush1.bf16.msra.mxu0 0
        %1117 = vmatprep.subr.bf16.mxu0 0
        %1118 = vmatpush1.bf16.msra.mxu0 0
        %1119 = vmatprep.subr.bf16.mxu0 0
        %1120 = vmatpush1.bf16.msra.mxu0 0
        %1121 = vmatprep.subr.bf16.mxu0 0
        %1122 = vmatpush1.bf16.msra.mxu0 0
        %1123 = vmatprep.mubr.bf16.mxu0 0
        %1124 = vmatmul.mubr.bf16.gmra.mrb[0].mxu0 %v330
        %v1125 = vpop.f32.mrb[0].mxu0
        %v1126 = vadd.f32 %v858, %v1125
        %v1127 = vpop.f32.mrb[0].mxu0
        %v1128 = vpop.f32.mrb[0].mxu0
        %v1129 = vpop.f32.mrb[0].mxu0
        %1130 = vdwg.mxu0
        %v1147 = vunpack.c.l.b16 %v823
        %v1148 = vunpack.c.l.b16 %v824
        %v1149 = vunpack.c.l.b16 %v825
        %v1150 = vunpack.c.l.b16 %v826
        %v1151 = vunpack.c.l.b16 %v827
        %v1152 = vunpack.c.l.b16 %v828
        %v1153 = vunpack.c.l.b16 %v829
        %v1154 = vunpack.c.l.b16 %v830
        %v1155 = vunpack.c.l.b16 %v831
        %v1156 = vunpack.c.l.b16 %v832
        %v1157 = vunpack.c.l.b16 %v833
        %v1158 = vunpack.c.l.b16 %v834
        %v1159 = vunpack.c.l.b16 %v835
        %v1160 = vunpack.c.l.b16 %v836
        %v1161 = vunpack.c.l.b16 %v837
        %v1162 = vunpack.c.l.b16 %v838
        %v1163 = vpack.c.b16 %v1148, %v1147
        %v1164 = vpack.c.b16 %v1150, %v1149
        %v1165 = vpack.c.b16 %v1152, %v1151
        %v1166 = vpack.c.b16 %v1154, %v1153
        %v1167 = vpack.c.b16 %v1156, %v1155
        %v1168 = vpack.c.b16 %v1158, %v1157
        %v1169 = vpack.c.b16 %v1160, %v1159
        %v1170 = vpack.c.b16 %v1162, %v1161
        %1179 = vmatprep.subr.bf16.mxu0 0
        %1180 = vmatpush1.bf16.msra.mxu0 %v1163
        %1181 = vmatprep.subr.bf16.mxu0 0
        %1182 = vmatpush1.bf16.msra.mxu0 %v1164
        %1183 = vmatprep.subr.bf16.mxu0 0
        %1184 = vmatpush1.bf16.msra.mxu0 %v1165
        %1185 = vmatprep.subr.bf16.mxu0 0
        %1186 = vmatpush1.bf16.msra.mxu0 %v1166
        %1187 = vmatprep.subr.bf16.mxu0 0
        %1188 = vmatpush1.bf16.msra.mxu0 %v1167
        %1189 = vmatprep.subr.bf16.mxu0 0
        %1190 = vmatpush1.bf16.msra.mxu0 %v1168
        %1191 = vmatprep.subr.bf16.mxu0 0
        %1192 = vmatpush1.bf16.msra.mxu0 %v1169
        %1193 = vmatprep.subr.bf16.mxu0 0
        %1194 = vmatpush1.bf16.msra.mxu0 %v1170
        %1195 = vmatprep.subr.bf16.mxu0 0
        %1196 = vmatpush1.bf16.msra.mxu0 0
        %1197 = vmatprep.subr.bf16.mxu0 0
        %1198 = vmatpush1.bf16.msra.mxu0 0
        %1199 = vmatprep.subr.bf16.mxu0 0
        %1200 = vmatpush1.bf16.msra.mxu0 0
        %1201 = vmatprep.subr.bf16.mxu0 0
        %1202 = vmatpush1.bf16.msra.mxu0 0
        %1203 = vmatprep.subr.bf16.mxu0 0
        %1204 = vmatpush1.bf16.msra.mxu0 0
        %1205 = vmatprep.subr.bf16.mxu0 0
        %1206 = vmatpush1.bf16.msra.mxu0 0
        %1207 = vmatprep.subr.bf16.mxu0 0
        %1208 = vmatpush1.bf16.msra.mxu0 0
        %1209 = vmatprep.subr.bf16.mxu0 0
        %1210 = vmatpush1.bf16.msra.mxu0 0
        %1211 = vmatprep.mubr.bf16.mxu0 0
        %1212 = vmatmul.mubr.bf16.gmra.mrb[0].mxu0 %v330
        %v1213 = vpop.f32.mrb[0].mxu0
        %v1214 = vadd.f32 %v862, %v1213
        %v1215 = vpop.f32.mrb[0].mxu0
        %v1216 = vpop.f32.mrb[0].mxu0
        %v1217 = vpop.f32.mrb[0].mxu0
        %1218 = vdwg.mxu0
        %v1219 = vld [vmem:[%s3] sm:$0xf]
        %v1220 = vld [vmem:[%s3 + $0x4] sm:$0xf]
        %v1221 = vld [vmem:[%s3 + $0x8] sm:$0xf]
        %v1222 = vld [vmem:[%s3 + $0xc] sm:$0xf]
        %v1223 = vld [vmem:[%s3 + $0x10] sm:$0xf]
        %v1224 = vld [vmem:[%s3 + $0x14] sm:$0xf]
        %v1225 = vld [vmem:[%s3 + $0x18] sm:$0xf]
        %v1226 = vld [vmem:[%s3 + $0x1c] sm:$0xf]
        %v1227 = vld [vmem:[%s3 + $0x20] sm:$0xf]
        %v1228 = vld [vmem:[%s3 + $0x24] sm:$0xf]
        %v1229 = vld [vmem:[%s3 + $0x28] sm:$0xf]
        %v1230 = vld [vmem:[%s3 + $0x2c] sm:$0xf]
        %v1231 = vld [vmem:[%s3 + $0x30] sm:$0xf]
        %v1232 = vld [vmem:[%s3 + $0x34] sm:$0xf]
        %v1233 = vld [vmem:[%s3 + $0x38] sm:$0xf]
        %v1234 = vld [vmem:[%s3 + $0x3c] sm:$0xf]
        %v1235 = vld [vmem:[%s3 + $0x40] sm:$0xf]
        %v1236 = vld [vmem:[%s3 + $0x44] sm:$0xf]
        %v1237 = vld [vmem:[%s3 + $0x48] sm:$0xf]
        %v1238 = vld [vmem:[%s3 + $0x4c] sm:$0xf]
        %v1239 = vld [vmem:[%s3 + $0x50] sm:$0xf]
        %v1240 = vld [vmem:[%s3 + $0x54] sm:$0xf]
        %v1241 = vld [vmem:[%s3 + $0x58] sm:$0xf]
        %v1242 = vld [vmem:[%s3 + $0x5c] sm:$0xf]
        %v1243 = vld [vmem:[%s3 + $0x60] sm:$0xf]
        %v1244 = vld [vmem:[%s3 + $0x64] sm:$0xf]
        %v1245 = vld [vmem:[%s3 + $0x68] sm:$0xf]
        %v1246 = vld [vmem:[%s3 + $0x6c] sm:$0xf]
        %v1247 = vld [vmem:[%s3 + $0x70] sm:$0xf]
        %v1248 = vld [vmem:[%s3 + $0x74] sm:$0xf]
        %v1249 = vld [vmem:[%s3 + $0x78] sm:$0xf]
        %v1250 = vld [vmem:[%s3 + $0x7c] sm:$0xf]
        %v1251 = vld [vmem:[%s3 + $0x80] sm:$0xf]
        %v1252 = vld [vmem:[%s3 + $0x84] sm:$0xf]
        %v1253 = vld [vmem:[%s3 + $0x88] sm:$0xf]
        %v1254 = vld [vmem:[%s3 + $0x8c] sm:$0xf]
        %v1255 = vld [vmem:[%s3 + $0x90] sm:$0xf]
        %v1256 = vld [vmem:[%s3 + $0x94] sm:$0xf]
        %v1257 = vld [vmem:[%s3 + $0x98] sm:$0xf]
        %v1258 = vld [vmem:[%s3 + $0x9c] sm:$0xf]
        %v1259 = vld [vmem:[%s3 + $0xa0] sm:$0xf]
        %v1260 = vld [vmem:[%s3 + $0xa4] sm:$0xf]
        %v1261 = vld [vmem:[%s3 + $0xa8] sm:$0xf]
        %v1262 = vld [vmem:[%s3 + $0xac] sm:$0xf]
        %v1263 = vld [vmem:[%s3 + $0xb0] sm:$0xf]
        %v1264 = vld [vmem:[%s3 + $0xb4] sm:$0xf]
        %v1265 = vld [vmem:[%s3 + $0xb8] sm:$0xf]
        %v1266 = vld [vmem:[%s3 + $0xbc] sm:$0xf]
        %v1267 = vld [vmem:[%s3 + $0xc0] sm:$0xf]
        %v1268 = vld [vmem:[%s3 + $0xc4] sm:$0xf]
        %v1269 = vld [vmem:[%s3 + $0xc8] sm:$0xf]
        %v1270 = vld [vmem:[%s3 + $0xcc] sm:$0xf]
        %v1271 = vld [vmem:[%s3 + $0xd0] sm:$0xf]
        %v1272 = vld [vmem:[%s3 + $0xd4] sm:$0xf]
        %v1273 = vld [vmem:[%s3 + $0xd8] sm:$0xf]
        %v1274 = vld [vmem:[%s3 + $0xdc] sm:$0xf]
        %v1275 = vld [vmem:[%s3 + $0xe0] sm:$0xf]
        %v1276 = vld [vmem:[%s3 + $0xe4] sm:$0xf]
        %v1277 = vld [vmem:[%s3 + $0xe8] sm:$0xf]
        %v1278 = vld [vmem:[%s3 + $0xec] sm:$0xf]
        %v1279 = vld [vmem:[%s3 + $0xf0] sm:$0xf]
        %v1280 = vld [vmem:[%s3 + $0xf4] sm:$0xf]
        %v1281 = vld [vmem:[%s3 + $0xf8] sm:$0xf]
        %v1282 = vld [vmem:[%s3 + $0xfc] sm:$0xf]
        %v1283 = vld [vmem:[%s7] sm:$0x1]
        %v1284 = vld [vmem:[%s7 + $0x1] sm:$0x1]
        %v1285 = vld [vmem:[%s7 + $0x2] sm:$0x1]
        %v1286 = vld [vmem:[%s7 + $0x3] sm:$0x1]
        %v1291 = vlaneseq
        %v1292 = vshrl.u32 %v1291, 7
        %v1293 = vsub.s32 0, %v1292
        %v1294 = vrot.slane %v1283, %v1293
        %v1295 = vlaneseq
        %v1296 = vshrl.u32 %v1295, 7
        %v1297 = vsub.s32 0, %v1296
        %v1298 = vrot.slane %v1284, %v1297
        %v1299 = vlaneseq
        %v1300 = vshrl.u32 %v1299, 7
        %v1301 = vsub.s32 0, %v1300
        %v1302 = vrot.slane %v1285, %v1301
        %v1303 = vlaneseq
        %v1304 = vshrl.u32 %v1303, 7
        %v1305 = vsub.s32 0, %v1304
        %v1306 = vrot.slane %v1286, %v1305
        %v1327 = vunpack.c.l.b16 %v1219
        %v1328 = vunpack.c.l.b16 %v1220
        %v1329 = vunpack.c.l.b16 %v1221
        %v1330 = vunpack.c.l.b16 %v1222
        %v1331 = vunpack.c.l.b16 %v1223
        %v1332 = vunpack.c.l.b16 %v1224
        %v1333 = vunpack.c.l.b16 %v1225
        %v1334 = vunpack.c.l.b16 %v1226
        %v1335 = vunpack.c.l.b16 %v1227
        %v1336 = vunpack.c.l.b16 %v1228
        %v1337 = vunpack.c.l.b16 %v1229
        %v1338 = vunpack.c.l.b16 %v1230
        %v1339 = vunpack.c.l.b16 %v1231
        %v1340 = vunpack.c.l.b16 %v1232
        %v1341 = vunpack.c.l.b16 %v1233
        %v1342 = vunpack.c.l.b16 %v1234
        %v1343 = vpack.c.b16 %v1328, %v1327
        %v1344 = vpack.c.b16 %v1330, %v1329
        %v1345 = vpack.c.b16 %v1332, %v1331
        %v1346 = vpack.c.b16 %v1334, %v1333
        %v1347 = vpack.c.b16 %v1336, %v1335
        %v1348 = vpack.c.b16 %v1338, %v1337
        %v1349 = vpack.c.b16 %v1340, %v1339
        %v1350 = vpack.c.b16 %v1342, %v1341
        %1359 = vmatprep.subr.bf16.mxu0 0
        %1360 = vmatpush1.bf16.msra.mxu0 %v1343
        %1361 = vmatprep.subr.bf16.mxu0 0
        %1362 = vmatpush1.bf16.msra.mxu0 %v1344
        %1363 = vmatprep.subr.bf16.mxu0 0
        %1364 = vmatpush1.bf16.msra.mxu0 %v1345
        %1365 = vmatprep.subr.bf16.mxu0 0
        %1366 = vmatpush1.bf16.msra.mxu0 %v1346
        %1367 = vmatprep.subr.bf16.mxu0 0
        %1368 = vmatpush1.bf16.msra.mxu0 %v1347
        %1369 = vmatprep.subr.bf16.mxu0 0
        %1370 = vmatpush1.bf16.msra.mxu0 %v1348
        %1371 = vmatprep.subr.bf16.mxu0 0
        %1372 = vmatpush1.bf16.msra.mxu0 %v1349
        %1373 = vmatprep.subr.bf16.mxu0 0
        %1374 = vmatpush1.bf16.msra.mxu0 %v1350
        %1375 = vmatprep.subr.bf16.mxu0 0
        %1376 = vmatpush1.bf16.msra.mxu0 0
        %1377 = vmatprep.subr.bf16.mxu0 0
        %1378 = vmatpush1.bf16.msra.mxu0 0
        %1379 = vmatprep.subr.bf16.mxu0 0
        %1380 = vmatpush1.bf16.msra.mxu0 0
        %1381 = vmatprep.subr.bf16.mxu0 0
        %1382 = vmatpush1.bf16.msra.mxu0 0
        %1383 = vmatprep.subr.bf16.mxu0 0
        %1384 = vmatpush1.bf16.msra.mxu0 0
        %1385 = vmatprep.subr.bf16.mxu0 0
        %1386 = vmatpush1.bf16.msra.mxu0 0
        %1387 = vmatprep.subr.bf16.mxu0 0
        %1388 = vmatpush1.bf16.msra.mxu0 0
        %1389 = vmatprep.subr.bf16.mxu0 0
        %1390 = vmatpush1.bf16.msra.mxu0 0
        %1391 = vmatprep.mubr.bf16.mxu0 0
        %1392 = vmatmul.mubr.bf16.gmra.mrb[0].mxu0 %v330
        %v1393 = vpop.f32.mrb[0].mxu0
        %v1394 = vadd.f32 %v1294, %v1393
        %v1395 = vpop.f32.mrb[0].mxu0
        %v1396 = vpop.f32.mrb[0].mxu0
        %v1397 = vpop.f32.mrb[0].mxu0
        %1398 = vdwg.mxu0
        %v1415 = vunpack.c.l.b16 %v1235
        %v1416 = vunpack.c.l.b16 %v1236
        %v1417 = vunpack.c.l.b16 %v1237
        %v1418 = vunpack.c.l.b16 %v1238
        %v1419 = vunpack.c.l.b16 %v1239
        %v1420 = vunpack.c.l.b16 %v1240
        %v1421 = vunpack.c.l.b16 %v1241
        %v1422 = vunpack.c.l.b16 %v1242
        %v1423 = vunpack.c.l.b16 %v1243
        %v1424 = vunpack.c.l.b16 %v1244
        %v1425 = vunpack.c.l.b16 %v1245
        %v1426 = vunpack.c.l.b16 %v1246
        %v1427 = vunpack.c.l.b16 %v1247
        %v1428 = vunpack.c.l.b16 %v1248
        %v1429 = vunpack.c.l.b16 %v1249
        %v1430 = vunpack.c.l.b16 %v1250
        %v1431 = vpack.c.b16 %v1416, %v1415
        %v1432 = vpack.c.b16 %v1418, %v1417
        %v1433 = vpack.c.b16 %v1420, %v1419
        %v1434 = vpack.c.b16 %v1422, %v1421
        %v1435 = vpack.c.b16 %v1424, %v1423
        %v1436 = vpack.c.b16 %v1426, %v1425
        %v1437 = vpack.c.b16 %v1428, %v1427
        %v1438 = vpack.c.b16 %v1430, %v1429
        %1447 = vmatprep.subr.bf16.mxu0 0
        %1448 = vmatpush1.bf16.msra.mxu0 %v1431
        %1449 = vmatprep.subr.bf16.mxu0 0
        %1450 = vmatpush1.bf16.msra.mxu0 %v1432
        %1451 = vmatprep.subr.bf16.mxu0 0
        %1452 = vmatpush1.bf16.msra.mxu0 %v1433
        %1453 = vmatprep.subr.bf16.mxu0 0
        %1454 = vmatpush1.bf16.msra.mxu0 %v1434
        %1455 = vmatprep.subr.bf16.mxu0 0
        %1456 = vmatpush1.bf16.msra.mxu0 %v1435
        %1457 = vmatprep.subr.bf16.mxu0 0
        %1458 = vmatpush1.bf16.msra.mxu0 %v1436
        %1459 = vmatprep.subr.bf16.mxu0 0
        %1460 = vmatpush1.bf16.msra.mxu0 %v1437
        %1461 = vmatprep.subr.bf16.mxu0 0
        %1462 = vmatpush1.bf16.msra.mxu0 %v1438
        %1463 = vmatprep.subr.bf16.mxu0 0
        %1464 = vmatpush1.bf16.msra.mxu0 0
        %1465 = vmatprep.subr.bf16.mxu0 0
        %1466 = vmatpush1.bf16.msra.mxu0 0
        %1467 = vmatprep.subr.bf16.mxu0 0
        %1468 = vmatpush1.bf16.msra.mxu0 0
        %1469 = vmatprep.subr.bf16.mxu0 0
        %1470 = vmatpush1.bf16.msra.mxu0 0
        %1471 = vmatprep.subr.bf16.mxu0 0
        %1472 = vmatpush1.bf16.msra.mxu0 0
        %1473 = vmatprep.subr.bf16.mxu0 0
        %1474 = vmatpush1.bf16.msra.mxu0 0
        %1475 = vmatprep.subr.bf16.mxu0 0
        %1476 = vmatpush1.bf16.msra.mxu0 0
        %1477 = vmatprep.subr.bf16.mxu0 0
        %1478 = vmatpush1.bf16.msra.mxu0 0
        %1479 = vmatprep.mubr.bf16.mxu0 0
        %1480 = vmatmul.mubr.bf16.gmra.mrb[0].mxu0 %v330
        %v1481 = vpop.f32.mrb[0].mxu0
        %v1482 = vadd.f32 %v1298, %v1481
        %v1483 = vpop.f32.mrb[0].mxu0
        %v1484 = vpop.f32.mrb[0].mxu0
        %v1485 = vpop.f32.mrb[0].mxu0
        %1486 = vdwg.mxu0
        %v1503 = vunpack.c.l.b16 %v1251
        %v1504 = vunpack.c.l.b16 %v1252
        %v1505 = vunpack.c.l.b16 %v1253
        %v1506 = vunpack.c.l.b16 %v1254
        %v1507 = vunpack.c.l.b16 %v1255
        %v1508 = vunpack.c.l.b16 %v1256
        %v1509 = vunpack.c.l.b16 %v1257
        %v1510 = vunpack.c.l.b16 %v1258
        %v1511 = vunpack.c.l.b16 %v1259
        %v1512 = vunpack.c.l.b16 %v1260
        %v1513 = vunpack.c.l.b16 %v1261
        %v1514 = vunpack.c.l.b16 %v1262
        %v1515 = vunpack.c.l.b16 %v1263
        %v1516 = vunpack.c.l.b16 %v1264
        %v1517 = vunpack.c.l.b16 %v1265
        %v1518 = vunpack.c.l.b16 %v1266
        %v1519 = vpack.c.b16 %v1504, %v1503
        %v1520 = vpack.c.b16 %v1506, %v1505
        %v1521 = vpack.c.b16 %v1508, %v1507
        %v1522 = vpack.c.b16 %v1510, %v1509
        %v1523 = vpack.c.b16 %v1512, %v1511
        %v1524 = vpack.c.b16 %v1514, %v1513
        %v1525 = vpack.c.b16 %v1516, %v1515
        %v1526 = vpack.c.b16 %v1518, %v1517
        %1535 = vmatprep.subr.bf16.mxu0 0
        %1536 = vmatpush1.bf16.msra.mxu0 %v1519
        %1537 = vmatprep.subr.bf16.mxu0 0
        %1538 = vmatpush1.bf16.msra.mxu0 %v1520
        %1539 = vmatprep.subr.bf16.mxu0 0
        %1540 = vmatpush1.bf16.msra.mxu0 %v1521
        %1541 = vmatprep.subr.bf16.mxu0 0
        %1542 = vmatpush1.bf16.msra.mxu0 %v1522
        %1543 = vmatprep.subr.bf16.mxu0 0
        %1544 = vmatpush1.bf16.msra.mxu0 %v1523
        %1545 = vmatprep.subr.bf16.mxu0 0
        %1546 = vmatpush1.bf16.msra.mxu0 %v1524
        %1547 = vmatprep.subr.bf16.mxu0 0
        %1548 = vmatpush1.bf16.msra.mxu0 %v1525
        %1549 = vmatprep.subr.bf16.mxu0 0
        %1550 = vmatpush1.bf16.msra.mxu0 %v1526
        %1551 = vmatprep.subr.bf16.mxu0 0
        %1552 = vmatpush1.bf16.msra.mxu0 0
        %1553 = vmatprep.subr.bf16.mxu0 0
        %1554 = vmatpush1.bf16.msra.mxu0 0
        %1555 = vmatprep.subr.bf16.mxu0 0
        %1556 = vmatpush1.bf16.msra.mxu0 0
        %1557 = vmatprep.subr.bf16.mxu0 0
        %1558 = vmatpush1.bf16.msra.mxu0 0
        %1559 = vmatprep.subr.bf16.mxu0 0
        %1560 = vmatpush1.bf16.msra.mxu0 0
        %1561 = vmatprep.subr.bf16.mxu0 0
        %1562 = vmatpush1.bf16.msra.mxu0 0
        %1563 = vmatprep.subr.bf16.mxu0 0
        %1564 = vmatpush1.bf16.msra.mxu0 0
        %1565 = vmatprep.subr.bf16.mxu0 0
        %1566 = vmatpush1.bf16.msra.mxu0 0
        %1567 = vmatprep.mubr.bf16.mxu0 0
        %1568 = vmatmul.mubr.bf16.gmra.mrb[0].mxu0 %v330
        %v1569 = vpop.f32.mrb[0].mxu0
        %v1570 = vadd.f32 %v1302, %v1569
        %v1571 = vpop.f32.mrb[0].mxu0
        %v1572 = vpop.f32.mrb[0].mxu0
        %v1573 = vpop.f32.mrb[0].mxu0
        %1574 = vdwg.mxu0
        %v1591 = vunpack.c.l.b16 %v1267
        %v1592 = vunpack.c.l.b16 %v1268
        %v1593 = vunpack.c.l.b16 %v1269
        %v1594 = vunpack.c.l.b16 %v1270
        %v1595 = vunpack.c.l.b16 %v1271
        %v1596 = vunpack.c.l.b16 %v1272
        %v1597 = vunpack.c.l.b16 %v1273
        %v1598 = vunpack.c.l.b16 %v1274
        %v1599 = vunpack.c.l.b16 %v1275
        %v1600 = vunpack.c.l.b16 %v1276
        %v1601 = vunpack.c.l.b16 %v1277
        %v1602 = vunpack.c.l.b16 %v1278
        %v1603 = vunpack.c.l.b16 %v1279
        %v1604 = vunpack.c.l.b16 %v1280
        %v1605 = vunpack.c.l.b16 %v1281
        %v1606 = vunpack.c.l.b16 %v1282
        %v1607 = vpack.c.b16 %v1592, %v1591
        %v1608 = vpack.c.b16 %v1594, %v1593
        %v1609 = vpack.c.b16 %v1596, %v1595
        %v1610 = vpack.c.b16 %v1598, %v1597
        %v1611 = vpack.c.b16 %v1600, %v1599
        %v1612 = vpack.c.b16 %v1602, %v1601
        %v1613 = vpack.c.b16 %v1604, %v1603
        %v1614 = vpack.c.b16 %v1606, %v1605
        %1623 = vmatprep.subr.bf16.mxu0 0
        %1624 = vmatpush1.bf16.msra.mxu0 %v1607
        %1625 = vmatprep.subr.bf16.mxu0 0
        %1626 = vmatpush1.bf16.msra.mxu0 %v1608
        %1627 = vmatprep.subr.bf16.mxu0 0
        %1628 = vmatpush1.bf16.msra.mxu0 %v1609
        %1629 = vmatprep.subr.bf16.mxu0 0
        %1630 = vmatpush1.bf16.msra.mxu0 %v1610
        %1631 = vmatprep.subr.bf16.mxu0 0
        %1632 = vmatpush1.bf16.msra.mxu0 %v1611
        %1633 = vmatprep.subr.bf16.mxu0 0
        %1634 = vmatpush1.bf16.msra.mxu0 %v1612
        %1635 = vmatprep.subr.bf16.mxu0 0
        %1636 = vmatpush1.bf16.msra.mxu0 %v1613
        %1637 = vmatprep.subr.bf16.mxu0 0
        %1638 = vmatpush1.bf16.msra.mxu0 %v1614
        %1639 = vmatprep.subr.bf16.mxu0 0
        %1640 = vmatpush1.bf16.msra.mxu0 0
        %1641 = vmatprep.subr.bf16.mxu0 0
        %1642 = vmatpush1.bf16.msra.mxu0 0
        %1643 = vmatprep.subr.bf16.mxu0 0
        %1644 = vmatpush1.bf16.msra.mxu0 0
        %1645 = vmatprep.subr.bf16.mxu0 0
        %1646 = vmatpush1.bf16.msra.mxu0 0
        %1647 = vmatprep.subr.bf16.mxu0 0
        %1648 = vmatpush1.bf16.msra.mxu0 0
        %1649 = vmatprep.subr.bf16.mxu0 0
        %1650 = vmatpush1.bf16.msra.mxu0 0
        %1651 = vmatprep.subr.bf16.mxu0 0
        %1652 = vmatpush1.bf16.msra.mxu0 0
        %1653 = vmatprep.subr.bf16.mxu0 0
        %1654 = vmatpush1.bf16.msra.mxu0 0
        %1655 = vmatprep.mubr.bf16.mxu0 0
        %1656 = vmatmul.mubr.bf16.gmra.mrb[0].mxu0 %v330
        %v1657 = vpop.f32.mrb[0].mxu0
        %v1658 = vadd.f32 %v1306, %v1657
        %v1659 = vpop.f32.mrb[0].mxu0
        %v1660 = vpop.f32.mrb[0].mxu0
        %v1661 = vpop.f32.mrb[0].mxu0
        %1662 = vdwg.mxu0
        %v1663 = vpack.c.bf16 %v506, %v506
        %v1664 = vpack.c.bf16 %v594, %v594
        %v1665 = vpack.c.bf16 %v682, %v682
        %v1666 = vpack.c.bf16 %v770, %v770
        %v1667 = vpack.c.bf16 %v950, %v950
        %v1668 = vpack.c.bf16 %v1038, %v1038
        %v1669 = vpack.c.bf16 %v1126, %v1126
        %v1670 = vpack.c.bf16 %v1214, %v1214
        %vm1671 = vcmask 261120
        %v1673 = vsel %vm1671, %v1663, 0
        %v1676 = vsel %vm1671, %v1667, 0
        %1678 = vmatprep.subr.bf16.mxu0 0
        %1679 = vmatpush1.bf16.xpose.msra.mxu0 %v1676
        %1680 = vmatprep.subr.bf16.mxu0 0
        %1681 = vmatpush1.bf16.xpose.msra.mxu0 0
        %1682 = vmatprep.subr.bf16.mxu0 0
        %1683 = vmatpush1.bf16.xpose.msra.mxu0 0
        %1684 = vmatprep.subr.bf16.mxu0 0
        %1685 = vmatpush1.bf16.xpose.msra.mxu0 0
        %1686 = vmatprep.subr.bf16.mxu0 0
        %1687 = vmatpush1.bf16.xpose.msra.mxu0 0
        %1688 = vmatprep.subr.bf16.mxu0 0
        %1689 = vmatpush1.bf16.xpose.msra.mxu0 0
        %1690 = vmatprep.subr.bf16.mxu0 0
        %1691 = vmatpush1.bf16.xpose.msra.mxu0 0
        %1692 = vmatprep.subr.bf16.mxu0 0
        %1693 = vmatpush1.bf16.xpose.msra.mxu0 0
        %1694 = vmatprep.subr.bf16.mxu0 0
        %1695 = vmatpush1.bf16.xpose.msra.mxu0 0
        %1696 = vmatprep.subr.bf16.mxu0 0
        %1697 = vmatpush1.bf16.xpose.msra.mxu0 0
        %1698 = vmatprep.subr.bf16.mxu0 0
        %1699 = vmatpush1.bf16.xpose.msra.mxu0 0
        %1700 = vmatprep.subr.bf16.mxu0 0
        %1701 = vmatpush1.bf16.xpose.msra.mxu0 0
        %1702 = vmatprep.subr.bf16.mxu0 0
        %1703 = vmatpush1.bf16.xpose.msra.mxu0 0
        %1704 = vmatprep.subr.bf16.mxu0 0
        %1705 = vmatpush1.bf16.xpose.msra.mxu0 0
        %1706 = vmatprep.subr.bf16.mxu0 0
        %1707 = vmatpush1.bf16.xpose.msra.mxu0 0
        %1708 = vmatprep.subr.bf16.mxu0 0
        %1709 = vmatpush1.bf16.xpose.msra.mxu0 0
        %1710 = vmatprep.mubr.bf16.mxu0 0
        %1711 = vmatmul.mubr.bf16.gmra.mrb[0].mxu0 %v1673
        %v1712 = vpop.f32.mrb[0].mxu0
        %v1713 = vadd.f32 0.0, %v1712
        %v1714 = vpop.f32.mrb[0].mxu0
        %v1715 = vpop.f32.mrb[0].mxu0
        %v1716 = vpop.f32.mrb[0].mxu0
        %1717 = vdwg.mxu0
        %v1719 = vsel %vm1671, %v1664, 0
        %v1722 = vsel %vm1671, %v1668, 0
        %1724 = vmatprep.subr.bf16.mxu0 0
        %1725 = vmatpush1.bf16.xpose.msra.mxu0 %v1722
        %1726 = vmatprep.subr.bf16.mxu0 0
        %1727 = vmatpush1.bf16.xpose.msra.mxu0 0
        %1728 = vmatprep.subr.bf16.mxu0 0
        %1729 = vmatpush1.bf16.xpose.msra.mxu0 0
        %1730 = vmatprep.subr.bf16.mxu0 0
        %1731 = vmatpush1.bf16.xpose.msra.mxu0 0
        %1732 = vmatprep.subr.bf16.mxu0 0
        %1733 = vmatpush1.bf16.xpose.msra.mxu0 0
        %1734 = vmatprep.subr.bf16.mxu0 0
        %1735 = vmatpush1.bf16.xpose.msra.mxu0 0
        %1736 = vmatprep.subr.bf16.mxu0 0
        %1737 = vmatpush1.bf16.xpose.msra.mxu0 0
        %1738 = vmatprep.subr.bf16.mxu0 0
        %1739 = vmatpush1.bf16.xpose.msra.mxu0 0
        %1740 = vmatprep.subr.bf16.mxu0 0
        %1741 = vmatpush1.bf16.xpose.msra.mxu0 0
        %1742 = vmatprep.subr.bf16.mxu0 0
        %1743 = vmatpush1.bf16.xpose.msra.mxu0 0
        %1744 = vmatprep.subr.bf16.mxu0 0
        %1745 = vmatpush1.bf16.xpose.msra.mxu0 0
        %1746 = vmatprep.subr.bf16.mxu0 0
        %1747 = vmatpush1.bf16.xpose.msra.mxu0 0
        %1748 = vmatprep.subr.bf16.mxu0 0
        %1749 = vmatpush1.bf16.xpose.msra.mxu0 0
        %1750 = vmatprep.subr.bf16.mxu0 0
        %1751 = vmatpush1.bf16.xpose.msra.mxu0 0
        %1752 = vmatprep.subr.bf16.mxu0 0
        %1753 = vmatpush1.bf16.xpose.msra.mxu0 0
        %1754 = vmatprep.subr.bf16.mxu0 0
        %1755 = vmatpush1.bf16.xpose.msra.mxu0 0
        %1756 = vmatprep.mubr.bf16.mxu0 0
        %1757 = vmatmul.mubr.bf16.gmra.mrb[0].mxu0 %v1719
        %v1758 = vpop.f32.mrb[0].mxu0
        %v1759 = vadd.f32 0.0, %v1758
        %v1760 = vpop.f32.mrb[0].mxu0
        %v1761 = vpop.f32.mrb[0].mxu0
        %v1762 = vpop.f32.mrb[0].mxu0
        %1763 = vdwg.mxu0
        %v1765 = vsel %vm1671, %v1665, 0
        %v1768 = vsel %vm1671, %v1669, 0
        %1770 = vmatprep.subr.bf16.mxu0 0
        %1771 = vmatpush1.bf16.xpose.msra.mxu0 %v1768
        %1772 = vmatprep.subr.bf16.mxu0 0
        %1773 = vmatpush1.bf16.xpose.msra.mxu0 0
        %1774 = vmatprep.subr.bf16.mxu0 0
        %1775 = vmatpush1.bf16.xpose.msra.mxu0 0
        %1776 = vmatprep.subr.bf16.mxu0 0
        %1777 = vmatpush1.bf16.xpose.msra.mxu0 0
        %1778 = vmatprep.subr.bf16.mxu0 0
        %1779 = vmatpush1.bf16.xpose.msra.mxu0 0
        %1780 = vmatprep.subr.bf16.mxu0 0
        %1781 = vmatpush1.bf16.xpose.msra.mxu0 0
        %1782 = vmatprep.subr.bf16.mxu0 0
        %1783 = vmatpush1.bf16.xpose.msra.mxu0 0
        %1784 = vmatprep.subr.bf16.mxu0 0
        %1785 = vmatpush1.bf16.xpose.msra.mxu0 0
        %1786 = vmatprep.subr.bf16.mxu0 0
        %1787 = vmatpush1.bf16.xpose.msra.mxu0 0
        %1788 = vmatprep.subr.bf16.mxu0 0
        %1789 = vmatpush1.bf16.xpose.msra.mxu0 0
        %1790 = vmatprep.subr.bf16.mxu0 0
        %1791 = vmatpush1.bf16.xpose.msra.mxu0 0
        %1792 = vmatprep.subr.bf16.mxu0 0
        %1793 = vmatpush1.bf16.xpose.msra.mxu0 0
        %1794 = vmatprep.subr.bf16.mxu0 0
        %1795 = vmatpush1.bf16.xpose.msra.mxu0 0
        %1796 = vmatprep.subr.bf16.mxu0 0
        %1797 = vmatpush1.bf16.xpose.msra.mxu0 0
        %1798 = vmatprep.subr.bf16.mxu0 0
        %1799 = vmatpush1.bf16.xpose.msra.mxu0 0
        %1800 = vmatprep.subr.bf16.mxu0 0
        %1801 = vmatpush1.bf16.xpose.msra.mxu0 0
        %1802 = vmatprep.mubr.bf16.mxu0 0
        %1803 = vmatmul.mubr.bf16.gmra.mrb[0].mxu0 %v1765
        %v1804 = vpop.f32.mrb[0].mxu0
        %v1805 = vadd.f32 0.0, %v1804
        %v1806 = vpop.f32.mrb[0].mxu0
        %v1807 = vpop.f32.mrb[0].mxu0
        %v1808 = vpop.f32.mrb[0].mxu0
        %1809 = vdwg.mxu0
        %v1811 = vsel %vm1671, %v1666, 0
        %v1814 = vsel %vm1671, %v1670, 0
        %1816 = vmatprep.subr.bf16.mxu0 0
        %1817 = vmatpush1.bf16.xpose.msra.mxu0 %v1814
        %1818 = vmatprep.subr.bf16.mxu0 0
        %1819 = vmatpush1.bf16.xpose.msra.mxu0 0
        %1820 = vmatprep.subr.bf16.mxu0 0
        %1821 = vmatpush1.bf16.xpose.msra.mxu0 0
        %1822 = vmatprep.subr.bf16.mxu0 0
        %1823 = vmatpush1.bf16.xpose.msra.mxu0 0
        %1824 = vmatprep.subr.bf16.mxu0 0
        %1825 = vmatpush1.bf16.xpose.msra.mxu0 0
        %1826 = vmatprep.subr.bf16.mxu0 0
        %1827 = vmatpush1.bf16.xpose.msra.mxu0 0
        %1828 = vmatprep.subr.bf16.mxu0 0
        %1829 = vmatpush1.bf16.xpose.msra.mxu0 0
        %1830 = vmatprep.subr.bf16.mxu0 0
        %1831 = vmatpush1.bf16.xpose.msra.mxu0 0
        %1832 = vmatprep.subr.bf16.mxu0 0
        %1833 = vmatpush1.bf16.xpose.msra.mxu0 0
        %1834 = vmatprep.subr.bf16.mxu0 0
        %1835 = vmatpush1.bf16.xpose.msra.mxu0 0
        %1836 = vmatprep.subr.bf16.mxu0 0
        %1837 = vmatpush1.bf16.xpose.msra.mxu0 0
        %1838 = vmatprep.subr.bf16.mxu0 0
        %1839 = vmatpush1.bf16.xpose.msra.mxu0 0
        %1840 = vmatprep.subr.bf16.mxu0 0
        %1841 = vmatpush1.bf16.xpose.msra.mxu0 0
        %1842 = vmatprep.subr.bf16.mxu0 0
        %1843 = vmatpush1.bf16.xpose.msra.mxu0 0
        %1844 = vmatprep.subr.bf16.mxu0 0
        %1845 = vmatpush1.bf16.xpose.msra.mxu0 0
        %1846 = vmatprep.subr.bf16.mxu0 0
        %1847 = vmatpush1.bf16.xpose.msra.mxu0 0
        %1848 = vmatprep.mubr.bf16.mxu0 0
        %1849 = vmatmul.mubr.bf16.gmra.mrb[0].mxu0 %v1811
        %v1850 = vpop.f32.mrb[0].mxu0
        %v1851 = vadd.f32 0.0, %v1850
        %v1852 = vpop.f32.mrb[0].mxu0
        %v1853 = vpop.f32.mrb[0].mxu0
        %v1854 = vpop.f32.mrb[0].mxu0
        %1855 = vdwg.mxu0
        %v1856 = vlaneseq
        %v1857 = vshrl.u32 %v1856, 7
        %v1858 = vlaneseq
        %v1859 = vand.u32 %v1858, 127
        %vm1860 = vcmp.gt.s32.totalorder %v1859, %v1857
        %v1861 = vsel %vm1860, -100000.0, %v1713
        %v1862 = vsel %vm1860, -100000.0, %v1759
        %v1863 = vsel %vm1860, -100000.0, %v1805
        %v1864 = vsel %vm1860, -100000.0, %v1851
        %vm1865 = vcmask 64512
        %v1866 = vsel %vm1865, %v1861, -inf
        %1867 = vmax.xlane.f32.xlu0 %v1866
        %v1868 = vpop.xlane.xlu0 %1867
        %v1869 = vsel %vm1865, %v1862, -inf
        %1870 = vmax.xlane.f32.xlu0 %v1869
        %v1871 = vpop.xlane.xlu0 %1870
        %v1872 = vsel %vm1865, %v1863, -inf
        %1873 = vmax.xlane.f32.xlu0 %v1872
        %v1874 = vpop.xlane.xlu0 %1873
        %v1875 = vsel %vm1865, %v1864, -inf
        %1876 = vmax.xlane.f32.xlu0 %v1875
        %v1877 = vpop.xlane.xlu0 %1876
        %v1878 = vsub.f32 %v1861, %v1868
        %v1879 = vsub.f32 %v1862, %v1871
        %v1880 = vsub.f32 %v1863, %v1874
        %v1881 = vsub.f32 %v1864, %v1877
        %v1882 = vmul.f32 %v1878, 1.442695
        %v1883 = vpow.pop %v1882
        %v1884 = vmul.f32 %v1879, 1.442695
        %v1885 = vpow.pop %v1884
        %v1886 = vmul.f32 %v1880, 1.442695
        %v1887 = vpow.pop %v1886
        %v1888 = vmul.f32 %v1881, 1.442695
        %v1889 = vpow.pop %v1888
        %v1890 = vsel %vm1865, %v1883, 0.0
        %1891 = vadd.xlane.f32.xlu0 %v1890
        %v1892 = vpop.xlane.xlu0 %1891
        %v1893 = vsel %vm1865, %v1885, 0.0
        %1894 = vadd.xlane.f32.xlu0 %v1893
        %v1895 = vpop.xlane.xlu0 %1894
        %v1896 = vsel %vm1865, %v1887, 0.0
        %1897 = vadd.xlane.f32.xlu0 %v1896
        %v1898 = vpop.xlane.xlu0 %1897
        %v1899 = vsel %vm1865, %v1889, 0.0
        %1900 = vadd.xlane.f32.xlu0 %v1899
        %v1901 = vpop.xlane.xlu0 %1900
        %v1902 = vrcp.pop %v1892
        %v1903 = vrcp.pop %v1895
        %v1904 = vrcp.pop %v1898
        %v1905 = vrcp.pop %v1901
        %v1906 = vmul.f32 %v1883, %v1902
        %v1907 = vmul.f32 %v1885, %v1903
        %v1908 = vmul.f32 %v1887, %v1904
        %v1909 = vmul.f32 %v1889, %v1905
        %v1910 = vpack.c.bf16 %v1906, %v1906
        %v1911 = vpack.c.bf16 %v1907, %v1907
        %v1912 = vpack.c.bf16 %v1908, %v1908
        %v1913 = vpack.c.bf16 %v1909, %v1909
        %v1914 = vpack.c.bf16 %v1394, %v1394
        %v1915 = vpack.c.bf16 %v1482, %v1482
        %v1916 = vpack.c.bf16 %v1570, %v1570
        %v1917 = vpack.c.bf16 %v1658, %v1658
        %v1919 = vsel %vm1865, %v1910, 0
        %vm1921 = vcmask 1043456
        %v1923 = vsel %vm1921, %v1914, 0
        %1925 = vmatprep.subr.bf16.mxu0 0
        %1926 = vmatpush1.bf16.msra.mxu0 %v1923
        %1927 = vmatprep.subr.bf16.mxu0 0
        %1928 = vmatpush1.bf16.msra.mxu0 0
        %1929 = vmatprep.subr.bf16.mxu0 0
        %1930 = vmatpush1.bf16.msra.mxu0 0
        %1931 = vmatprep.subr.bf16.mxu0 0
        %1932 = vmatpush1.bf16.msra.mxu0 0
        %1933 = vmatprep.subr.bf16.mxu0 0
        %1934 = vmatpush1.bf16.msra.mxu0 0
        %1935 = vmatprep.subr.bf16.mxu0 0
        %1936 = vmatpush1.bf16.msra.mxu0 0
        %1937 = vmatprep.subr.bf16.mxu0 0
        %1938 = vmatpush1.bf16.msra.mxu0 0
        %1939 = vmatprep.subr.bf16.mxu0 0
        %1940 = vmatpush1.bf16.msra.mxu0 0
        %1941 = vmatprep.subr.bf16.mxu0 0
        %1942 = vmatpush1.bf16.msra.mxu0 0
        %1943 = vmatprep.subr.bf16.mxu0 0
        %1944 = vmatpush1.bf16.msra.mxu0 0
        %1945 = vmatprep.subr.bf16.mxu0 0
        %1946 = vmatpush1.bf16.msra.mxu0 0
        %1947 = vmatprep.subr.bf16.mxu0 0
        %1948 = vmatpush1.bf16.msra.mxu0 0
        %1949 = vmatprep.subr.bf16.mxu0 0
        %1950 = vmatpush1.bf16.msra.mxu0 0
        %1951 = vmatprep.subr.bf16.mxu0 0
        %1952 = vmatpush1.bf16.msra.mxu0 0
        %1953 = vmatprep.subr.bf16.mxu0 0
        %1954 = vmatpush1.bf16.msra.mxu0 0
        %1955 = vmatprep.subr.bf16.mxu0 0
        %1956 = vmatpush1.bf16.msra.mxu0 0
        %1957 = vmatprep.mubr.bf16.mxu0 0
        %1958 = vmatmul.mubr.bf16.gmra.mrb[0].mxu0 %v1919
        %v1959 = vpop.f32.mrb[0].mxu0
        %v1960 = vadd.f32 0.0, %v1959
        %v1961 = vpop.f32.mrb[0].mxu0
        %v1962 = vpop.f32.mrb[0].mxu0
        %v1963 = vpop.f32.mrb[0].mxu0
        %1964 = vdwg.mxu0
        %v1966 = vsel %vm1865, %v1911, 0
        %v1969 = vsel %vm1921, %v1915, 0
        %1971 = vmatprep.subr.bf16.mxu0 0
        %1972 = vmatpush1.bf16.msra.mxu0 %v1969
        %1973 = vmatprep.subr.bf16.mxu0 0
        %1974 = vmatpush1.bf16.msra.mxu0 0
        %1975 = vmatprep.subr.bf16.mxu0 0
        %1976 = vmatpush1.bf16.msra.mxu0 0
        %1977 = vmatprep.subr.bf16.mxu0 0
        %1978 = vmatpush1.bf16.msra.mxu0 0
        %1979 = vmatprep.subr.bf16.mxu0 0
        %1980 = vmatpush1.bf16.msra.mxu0 0
        %1981 = vmatprep.subr.bf16.mxu0 0
        %1982 = vmatpush1.bf16.msra.mxu0 0
        %1983 = vmatprep.subr.bf16.mxu0 0
        %1984 = vmatpush1.bf16.msra.mxu0 0
        %1985 = vmatprep.subr.bf16.mxu0 0
        %1986 = vmatpush1.bf16.msra.mxu0 0
        %1987 = vmatprep.subr.bf16.mxu0 0
        %1988 = vmatpush1.bf16.msra.mxu0 0
        %1989 = vmatprep.subr.bf16.mxu0 0
        %1990 = vmatpush1.bf16.msra.mxu0 0
        %1991 = vmatprep.subr.bf16.mxu0 0
        %1992 = vmatpush1.bf16.msra.mxu0 0
        %1993 = vmatprep.subr.bf16.mxu0 0
        %1994 = vmatpush1.bf16.msra.mxu0 0
        %1995 = vmatprep.subr.bf16.mxu0 0
        %1996 = vmatpush1.bf16.msra.mxu0 0
        %1997 = vmatprep.subr.bf16.mxu0 0
        %1998 = vmatpush1.bf16.msra.mxu0 0
        %1999 = vmatprep.subr.bf16.mxu0 0
        %2000 = vmatpush1.bf16.msra.mxu0 0
        %2001 = vmatprep.subr.bf16.mxu0 0
        %2002 = vmatpush1.bf16.msra.mxu0 0
        %2003 = vmatprep.mubr.bf16.mxu0 0
        %2004 = vmatmul.mubr.bf16.gmra.mrb[0].mxu0 %v1966
        %v2005 = vpop.f32.mrb[0].mxu0
        %v2006 = vadd.f32 0.0, %v2005
        %v2007 = vpop.f32.mrb[0].mxu0
        %v2008 = vpop.f32.mrb[0].mxu0
        %v2009 = vpop.f32.mrb[0].mxu0
        %2010 = vdwg.mxu0
        %v2012 = vsel %vm1865, %v1912, 0
        %v2015 = vsel %vm1921, %v1916, 0
        %2017 = vmatprep.subr.bf16.mxu0 0
        %2018 = vmatpush1.bf16.msra.mxu0 %v2015
        %2019 = vmatprep.subr.bf16.mxu0 0
        %2020 = vmatpush1.bf16.msra.mxu0 0
        %2021 = vmatprep.subr.bf16.mxu0 0
        %2022 = vmatpush1.bf16.msra.mxu0 0
        %2023 = vmatprep.subr.bf16.mxu0 0
        %2024 = vmatpush1.bf16.msra.mxu0 0
        %2025 = vmatprep.subr.bf16.mxu0 0
        %2026 = vmatpush1.bf16.msra.mxu0 0
        %2027 = vmatprep.subr.bf16.mxu0 0
        %2028 = vmatpush1.bf16.msra.mxu0 0
        %2029 = vmatprep.subr.bf16.mxu0 0
        %2030 = vmatpush1.bf16.msra.mxu0 0
        %2031 = vmatprep.subr.bf16.mxu0 0
        %2032 = vmatpush1.bf16.msra.mxu0 0
        %2033 = vmatprep.subr.bf16.mxu0 0
        %2034 = vmatpush1.bf16.msra.mxu0 0
        %2035 = vmatprep.subr.bf16.mxu0 0
        %2036 = vmatpush1.bf16.msra.mxu0 0
        %2037 = vmatprep.subr.bf16.mxu0 0
        %2038 = vmatpush1.bf16.msra.mxu0 0
        %2039 = vmatprep.subr.bf16.mxu0 0
        %2040 = vmatpush1.bf16.msra.mxu0 0
        %2041 = vmatprep.subr.bf16.mxu0 0
        %2042 = vmatpush1.bf16.msra.mxu0 0
        %2043 = vmatprep.subr.bf16.mxu0 0
        %2044 = vmatpush1.bf16.msra.mxu0 0
        %2045 = vmatprep.subr.bf16.mxu0 0
        %2046 = vmatpush1.bf16.msra.mxu0 0
        %2047 = vmatprep.subr.bf16.mxu0 0
        %2048 = vmatpush1.bf16.msra.mxu0 0
        %2049 = vmatprep.mubr.bf16.mxu0 0
        %2050 = vmatmul.mubr.bf16.gmra.mrb[0].mxu0 %v2012
        %v2051 = vpop.f32.mrb[0].mxu0
        %v2052 = vadd.f32 0.0, %v2051
        %v2053 = vpop.f32.mrb[0].mxu0
        %v2054 = vpop.f32.mrb[0].mxu0
        %v2055 = vpop.f32.mrb[0].mxu0
        %2056 = vdwg.mxu0
        %v2058 = vsel %vm1865, %v1913, 0
        %v2061 = vsel %vm1921, %v1917, 0
        %2063 = vmatprep.subr.bf16.mxu0 0
        %2064 = vmatpush1.bf16.msra.mxu0 %v2061
        %2065 = vmatprep.subr.bf16.mxu0 0
        %2066 = vmatpush1.bf16.msra.mxu0 0
        %2067 = vmatprep.subr.bf16.mxu0 0
        %2068 = vmatpush1.bf16.msra.mxu0 0
        %2069 = vmatprep.subr.bf16.mxu0 0
        %2070 = vmatpush1.bf16.msra.mxu0 0
        %2071 = vmatprep.subr.bf16.mxu0 0
        %2072 = vmatpush1.bf16.msra.mxu0 0
        %2073 = vmatprep.subr.bf16.mxu0 0
        %2074 = vmatpush1.bf16.msra.mxu0 0
        %2075 = vmatprep.subr.bf16.mxu0 0
        %2076 = vmatpush1.bf16.msra.mxu0 0
        %2077 = vmatprep.subr.bf16.mxu0 0
        %2078 = vmatpush1.bf16.msra.mxu0 0
        %2079 = vmatprep.subr.bf16.mxu0 0
        %2080 = vmatpush1.bf16.msra.mxu0 0
        %2081 = vmatprep.subr.bf16.mxu0 0
        %2082 = vmatpush1.bf16.msra.mxu0 0
        %2083 = vmatprep.subr.bf16.mxu0 0
        %2084 = vmatpush1.bf16.msra.mxu0 0
        %2085 = vmatprep.subr.bf16.mxu0 0
        %2086 = vmatpush1.bf16.msra.mxu0 0
        %2087 = vmatprep.subr.bf16.mxu0 0
        %2088 = vmatpush1.bf16.msra.mxu0 0
        %2089 = vmatprep.subr.bf16.mxu0 0
        %2090 = vmatpush1.bf16.msra.mxu0 0
        %2091 = vmatprep.subr.bf16.mxu0 0
        %2092 = vmatpush1.bf16.msra.mxu0 0
        %2093 = vmatprep.subr.bf16.mxu0 0
        %2094 = vmatpush1.bf16.msra.mxu0 0
        %2095 = vmatprep.mubr.bf16.mxu0 0
        %2096 = vmatmul.mubr.bf16.gmra.mrb[0].mxu0 %v2058
        %v2097 = vpop.f32.mrb[0].mxu0
        %v2098 = vadd.f32 0.0, %v2097
        %v2099 = vpop.f32.mrb[0].mxu0
        %v2100 = vpop.f32.mrb[0].mxu0
        %v2101 = vpop.f32.mrb[0].mxu0
        %2102 = vdwg.mxu0
        %v2103 = vpack.c.bf16 %v1960, %v1960
        %v2104 = vpack.c.bf16 %v2006, %v2006
        %v2105 = vpack.c.bf16 %v2052, %v2052
        %v2106 = vpack.c.bf16 %v2098, %v2098
        %v2107 = vld [vmem:[%s4] sm:$0xf]
        %v2108 = vld [vmem:[%s4 + $0x4] sm:$0xf]
        %v2109 = vld [vmem:[%s4 + $0x8] sm:$0xf]
        %v2110 = vld [vmem:[%s4 + $0xc] sm:$0xf]
        %v2111 = vld [vmem:[%s4 + $0x10] sm:$0xf]
        %v2112 = vld [vmem:[%s4 + $0x14] sm:$0xf]
        %v2113 = vld [vmem:[%s4 + $0x18] sm:$0xf]
        %v2114 = vld [vmem:[%s4 + $0x1c] sm:$0xf]
        %v2115 = vld [vmem:[%s4 + $0x20] sm:$0xf]
        %v2116 = vld [vmem:[%s4 + $0x24] sm:$0xf]
        %v2117 = vld [vmem:[%s4 + $0x28] sm:$0xf]
        %v2118 = vld [vmem:[%s4 + $0x2c] sm:$0xf]
        %v2119 = vld [vmem:[%s4 + $0x30] sm:$0xf]
        %v2120 = vld [vmem:[%s4 + $0x34] sm:$0xf]
        %v2121 = vld [vmem:[%s4 + $0x38] sm:$0xf]
        %v2122 = vld [vmem:[%s4 + $0x3c] sm:$0xf]
        %v2127 = vunpack.c.l.b16 %v2107
        %v2128 = vunpack.c.l.b16 %v2108
        %v2129 = vunpack.c.l.b16 %v2109
        %v2130 = vunpack.c.l.b16 %v2110
        %v2131 = vpack.c.b16 %v2128, %v2127
        %v2132 = vpack.c.b16 %v2130, %v2129
        %v2136 = vsel %vm1671, %v2103, 0
        %2138 = vmatprep.subr.bf16.mxu0 0
        %2139 = vmatpush1.bf16.msra.mxu0 %v2131
        %2140 = vmatprep.subr.bf16.mxu0 0
        %2141 = vmatpush1.bf16.msra.mxu0 %v2132
        %2142 = vmatprep.subr.bf16.mxu0 0
        %2143 = vmatpush1.bf16.msra.mxu0 0
        %2144 = vmatprep.subr.bf16.mxu0 0
        %2145 = vmatpush1.bf16.msra.mxu0 0
        %2146 = vmatprep.subr.bf16.mxu0 0
        %2147 = vmatpush1.bf16.msra.mxu0 0
        %2148 = vmatprep.subr.bf16.mxu0 0
        %2149 = vmatpush1.bf16.msra.mxu0 0
        %2150 = vmatprep.subr.bf16.mxu0 0
        %2151 = vmatpush1.bf16.msra.mxu0 0
        %2152 = vmatprep.subr.bf16.mxu0 0
        %2153 = vmatpush1.bf16.msra.mxu0 0
        %2154 = vmatprep.subr.bf16.mxu0 0
        %2155 = vmatpush1.bf16.msra.mxu0 0
        %2156 = vmatprep.subr.bf16.mxu0 0
        %2157 = vmatpush1.bf16.msra.mxu0 0
        %2158 = vmatprep.subr.bf16.mxu0 0
        %2159 = vmatpush1.bf16.msra.mxu0 0
        %2160 = vmatprep.subr.bf16.mxu0 0
        %2161 = vmatpush1.bf16.msra.mxu0 0
        %2162 = vmatprep.subr.bf16.mxu0 0
        %2163 = vmatpush1.bf16.msra.mxu0 0
        %2164 = vmatprep.subr.bf16.mxu0 0
        %2165 = vmatpush1.bf16.msra.mxu0 0
        %2166 = vmatprep.subr.bf16.mxu0 0
        %2167 = vmatpush1.bf16.msra.mxu0 0
        %2168 = vmatprep.subr.bf16.mxu0 0
        %2169 = vmatpush1.bf16.msra.mxu0 0
        %2170 = vmatprep.mubr.bf16.mxu0 0
        %2171 = vmatmul.mubr.bf16.gmra.mrb[0].mxu0 %v2136
        %v2172 = vpop.f32.mrb[0].mxu0
        %v2173 = vadd.f32 0.0, %v2172
        %v2174 = vpop.f32.mrb[0].mxu0
        %v2175 = vpop.f32.mrb[0].mxu0
        %v2176 = vpop.f32.mrb[0].mxu0
        %2177 = vdwg.mxu0
        %v2182 = vunpack.c.l.b16 %v2111
        %v2183 = vunpack.c.l.b16 %v2112
        %v2184 = vunpack.c.l.b16 %v2113
        %v2185 = vunpack.c.l.b16 %v2114
        %v2186 = vpack.c.b16 %v2183, %v2182
        %v2187 = vpack.c.b16 %v2185, %v2184
        %v2191 = vsel %vm1671, %v2104, 0
        %2193 = vmatprep.subr.bf16.mxu0 0
        %2194 = vmatpush1.bf16.msra.mxu0 %v2186
        %2195 = vmatprep.subr.bf16.mxu0 0
        %2196 = vmatpush1.bf16.msra.mxu0 %v2187
        %2197 = vmatprep.subr.bf16.mxu0 0
        %2198 = vmatpush1.bf16.msra.mxu0 0
        %2199 = vmatprep.subr.bf16.mxu0 0
        %2200 = vmatpush1.bf16.msra.mxu0 0
        %2201 = vmatprep.subr.bf16.mxu0 0
        %2202 = vmatpush1.bf16.msra.mxu0 0
        %2203 = vmatprep.subr.bf16.mxu0 0
        %2204 = vmatpush1.bf16.msra.mxu0 0
        %2205 = vmatprep.subr.bf16.mxu0 0
        %2206 = vmatpush1.bf16.msra.mxu0 0
        %2207 = vmatprep.subr.bf16.mxu0 0
        %2208 = vmatpush1.bf16.msra.mxu0 0
        %2209 = vmatprep.subr.bf16.mxu0 0
        %2210 = vmatpush1.bf16.msra.mxu0 0
        %2211 = vmatprep.subr.bf16.mxu0 0
        %2212 = vmatpush1.bf16.msra.mxu0 0
        %2213 = vmatprep.subr.bf16.mxu0 0
        %2214 = vmatpush1.bf16.msra.mxu0 0
        %2215 = vmatprep.subr.bf16.mxu0 0
        %2216 = vmatpush1.bf16.msra.mxu0 0
        %2217 = vmatprep.subr.bf16.mxu0 0
        %2218 = vmatpush1.bf16.msra.mxu0 0
        %2219 = vmatprep.subr.bf16.mxu0 0
        %2220 = vmatpush1.bf16.msra.mxu0 0
        %2221 = vmatprep.subr.bf16.mxu0 0
        %2222 = vmatpush1.bf16.msra.mxu0 0
        %2223 = vmatprep.subr.bf16.mxu0 0
        %2224 = vmatpush1.bf16.msra.mxu0 0
        %2225 = vmatprep.mubr.bf16.mxu0 0
        %2226 = vmatmul.mubr.bf16.gmra.mrb[0].mxu0 %v2191
        %v2227 = vpop.f32.mrb[0].mxu0
        %v2228 = vadd.f32 0.0, %v2227
        %v2229 = vpop.f32.mrb[0].mxu0
        %v2230 = vpop.f32.mrb[0].mxu0
        %v2231 = vpop.f32.mrb[0].mxu0
        %2232 = vdwg.mxu0
        %v2237 = vunpack.c.l.b16 %v2115
        %v2238 = vunpack.c.l.b16 %v2116
        %v2239 = vunpack.c.l.b16 %v2117
        %v2240 = vunpack.c.l.b16 %v2118
        %v2241 = vpack.c.b16 %v2238, %v2237
        %v2242 = vpack.c.b16 %v2240, %v2239
        %v2246 = vsel %vm1671, %v2105, 0
        %2248 = vmatprep.subr.bf16.mxu0 0
        %2249 = vmatpush1.bf16.msra.mxu0 %v2241
        %2250 = vmatprep.subr.bf16.mxu0 0
        %2251 = vmatpush1.bf16.msra.mxu0 %v2242
        %2252 = vmatprep.subr.bf16.mxu0 0
        %2253 = vmatpush1.bf16.msra.mxu0 0
        %2254 = vmatprep.subr.bf16.mxu0 0
        %2255 = vmatpush1.bf16.msra.mxu0 0
        %2256 = vmatprep.subr.bf16.mxu0 0
        %2257 = vmatpush1.bf16.msra.mxu0 0
        %2258 = vmatprep.subr.bf16.mxu0 0
        %2259 = vmatpush1.bf16.msra.mxu0 0
        %2260 = vmatprep.subr.bf16.mxu0 0
        %2261 = vmatpush1.bf16.msra.mxu0 0
        %2262 = vmatprep.subr.bf16.mxu0 0
        %2263 = vmatpush1.bf16.msra.mxu0 0
        %2264 = vmatprep.subr.bf16.mxu0 0
        %2265 = vmatpush1.bf16.msra.mxu0 0
        %2266 = vmatprep.subr.bf16.mxu0 0
        %2267 = vmatpush1.bf16.msra.mxu0 0
        %2268 = vmatprep.subr.bf16.mxu0 0
        %2269 = vmatpush1.bf16.msra.mxu0 0
        %2270 = vmatprep.subr.bf16.mxu0 0
        %2271 = vmatpush1.bf16.msra.mxu0 0
        %2272 = vmatprep.subr.bf16.mxu0 0
        %2273 = vmatpush1.bf16.msra.mxu0 0
        %2274 = vmatprep.subr.bf16.mxu0 0
        %2275 = vmatpush1.bf16.msra.mxu0 0
        %2276 = vmatprep.subr.bf16.mxu0 0
        %2277 = vmatpush1.bf16.msra.mxu0 0
        %2278 = vmatprep.subr.bf16.mxu0 0
        %2279 = vmatpush1.bf16.msra.mxu0 0
        %2280 = vmatprep.mubr.bf16.mxu0 0
        %2281 = vmatmul.mubr.bf16.gmra.mrb[0].mxu0 %v2246
        %v2282 = vpop.f32.mrb[0].mxu0
        %v2283 = vadd.f32 0.0, %v2282
        %v2284 = vpop.f32.mrb[0].mxu0
        %v2285 = vpop.f32.mrb[0].mxu0
        %v2286 = vpop.f32.mrb[0].mxu0
        %2287 = vdwg.mxu0
        %v2292 = vunpack.c.l.b16 %v2119
        %v2293 = vunpack.c.l.b16 %v2120
        %v2294 = vunpack.c.l.b16 %v2121
        %v2295 = vunpack.c.l.b16 %v2122
        %v2296 = vpack.c.b16 %v2293, %v2292
        %v2297 = vpack.c.b16 %v2295, %v2294
        %v2301 = vsel %vm1671, %v2106, 0
        %2303 = vmatprep.subr.bf16.mxu0 0
        %2304 = vmatpush1.bf16.msra.mxu0 %v2296
        %2305 = vmatprep.subr.bf16.mxu0 0
        %2306 = vmatpush1.bf16.msra.mxu0 %v2297
        %2307 = vmatprep.subr.bf16.mxu0 0
        %2308 = vmatpush1.bf16.msra.mxu0 0
        %2309 = vmatprep.subr.bf16.mxu0 0
        %2310 = vmatpush1.bf16.msra.mxu0 0
        %2311 = vmatprep.subr.bf16.mxu0 0
        %2312 = vmatpush1.bf16.msra.mxu0 0
        %2313 = vmatprep.subr.bf16.mxu0 0
        %2314 = vmatpush1.bf16.msra.mxu0 0
        %2315 = vmatprep.subr.bf16.mxu0 0
        %2316 = vmatpush1.bf16.msra.mxu0 0
        %2317 = vmatprep.subr.bf16.mxu0 0
        %2318 = vmatpush1.bf16.msra.mxu0 0
        %2319 = vmatprep.subr.bf16.mxu0 0
        %2320 = vmatpush1.bf16.msra.mxu0 0
        %2321 = vmatprep.subr.bf16.mxu0 0
        %2322 = vmatpush1.bf16.msra.mxu0 0
        %2323 = vmatprep.subr.bf16.mxu0 0
        %2324 = vmatpush1.bf16.msra.mxu0 0
        %2325 = vmatprep.subr.bf16.mxu0 0
        %2326 = vmatpush1.bf16.msra.mxu0 0
        %2327 = vmatprep.subr.bf16.mxu0 0
        %2328 = vmatpush1.bf16.msra.mxu0 0
        %2329 = vmatprep.subr.bf16.mxu0 0
        %2330 = vmatpush1.bf16.msra.mxu0 0
        %2331 = vmatprep.subr.bf16.mxu0 0
        %2332 = vmatpush1.bf16.msra.mxu0 0
        %2333 = vmatprep.subr.bf16.mxu0 0
        %2334 = vmatpush1.bf16.msra.mxu0 0
        %2335 = vmatprep.mubr.bf16.mxu0 0
        %2336 = vmatmul.mubr.bf16.gmra.mrb[0].mxu0 %v2301
        %v2337 = vpop.f32.mrb[0].mxu0
        %v2338 = vadd.f32 0.0, %v2337
        %v2339 = vpop.f32.mrb[0].mxu0
        %v2340 = vpop.f32.mrb[0].mxu0
        %v2341 = vpop.f32.mrb[0].mxu0
        %2342 = vdwg.mxu0
        %v2343 = vadd.f32 %v2173, %v2228
        %v2344 = vadd.f32 %v2343, %v2283
        %v2345 = vadd.f32 %v2344, %v2338
        %v2346 = vld [vmem:[%s8] sm:$0x1]
        %v2348 = vlaneseq
        %v2349 = vshrl.u32 %v2348, 7
        %v2350 = vsub.s32 0, %v2349
        %v2351 = vrot.slane %v2346, %v2350
        %v2353 = vadd.f32 %v2345, %v2351
        %2354 = vst [vmem:[%s323] sm:$0xff] %v2353
        %s2355 = sand.u32 %s225, 1
        %s2356 = scalar_lea.sflag [#allocation3], %s2355
        %s2357 = sand.u32 %s225, 1
        %s2358 = smul.addr %s2357, 8
        %s2359 = scalar_lea.vmem [#allocation2], %s2358
        // Predicated region
        $region57: #{tpu_custom_call.1} parent=55 // pred_check
          %p2360 = pneg %p235
        $region58: #{tpu_custom_call.1} parent=55 // pred_check_branch
          %2362 = sbr.rel (%p2360) target = $region60
        $region59: #{tpu_custom_call.1} parent=55 // pred_region
          %s2364 = ssub.s32 128, 128
          %2365 = vsyncadd %s2356, %s2364
          %s2366 = smul.addr %s23, 128
          %s2367 = scalar_lea.hbm %s9, %s2366
          %s2369 = sshll.u32 %s2359, 4
          %s2370 = int_to_ptr.vmem [resolvable:$true] %s2369
          %2372 = dma.vmem_to_hbm [thread:$0]  %s2370, 128, %s2367, %s2356
        $region60: #{tpu_custom_call.1} parent=55 // pred_fallthru
          _
      $region56: #{tpu_custom_call.1} parent=5 // pred_fallthru
        _
      %p2373 = scmp.le.s32.totalorder 2, %s18
      // Predicated region
      $region61: #{tpu_custom_call.1} parent=5 // pred_check
        %p2374 = pneg %p2373
      $region62: #{tpu_custom_call.1} parent=5 // pred_check_branch
        %2376 = sbr.rel (%p2374) target = $region64
      $region63: #{tpu_custom_call.1} parent=5 // pred_region
        %s2377 = ssub.s32 %s18, 2
        // Predicated region
        $region65: #{tpu_custom_call.1} parent=63 // pred_check
          %p2378 = pneg %p241
        $region66: #{tpu_custom_call.1} parent=63 // pred_check_branch
          %2380 = sbr.rel (%p2378) target = $region68
        $region67: #{tpu_custom_call.1} parent=63 // pred_region
          %s2381 = sand.u32 %s226, 1
          %s2382 = scalar_lea.sflag [#allocation3], %s2381
          %s2383 = sand.u32 %s226, 1
          %s2384 = smul.addr %s2383, 8
          %s2385 = scalar_lea.vmem [#allocation2], %s2384
          %2386 = dma.done %s2382, 128
        $region68: #{tpu_custom_call.1} parent=63 // pred_fallthru
          _
      $region64: #{tpu_custom_call.1} parent=5 // pred_fallthru
        _
    $region6: #{tpu_custom_call.1} parent=1 // loop_footer
      %s22 = sadd.s32 1, %s18
    $region7: #{tpu_custom_call.1} parent=1 // loop_footer_branch
      %17 = sbr.rel target = $region3
    $region8: #{tpu_custom_call.1} parent=1 // loop_exit
      _
    %2387 = vsyncpa [#allocation3], 1
    %s2388 = scalar_lea.sflag [#allocation3], 1
    %2389 = vsyncpa %s2388, 1

</llo_original>
